<compile_context>
chip_gen: v6e
topology: v6e:2x2x1
jax: 0.10.0
libtpu: 0.0.40
codegen_flags: <defaults>
</compile_context>

<pallas_src>
import functools

import jax
import jax.numpy as jnp
import numpy as np
from jax.experimental import pallas as pl
from jax.experimental.pallas import tpu as pltpu

NEG_SLOPE = 0.01  # nn.LeakyReLU() default negative_slope
BN_EPS = 1e-5


def _leaky(x):
    return jnp.where(x > 0, x, NEG_SLOPE * x)


def _select_domain_rows(dom, tbl_ref, col_start, width, n_domain):
    """Per-row gather tbl[dom[i], col_start:col_start+width] via an exact
    n_domain-way select on the VPU (no f32 one-hot MXU matmul, no per-row
    scale/shift stream from HBM). `col_start`/`width` are static, lane-aligned."""
    sel = jnp.broadcast_to(
        tbl_ref[0, col_start:col_start + width][None, :],
        (dom.shape[0], width))
    for d in range(1, n_domain):
        row = tbl_ref[d, col_start:col_start + width][None, :]
        sel = jnp.where(dom == d, row, sel)
    return sel


def residual_layer_kernel(dom_ref, x_ref, w01_ref, w2_ref, tbl_ref, o_ref, *,
                          n_domain):
    dout = o_ref.shape[-1]                 # lane-padded Dout (multiple of 128)
    dom = dom_ref[...]                     # (tile_b, 1) int32

    # --- stage 1: trans + net[0] share the LHS x -> one (tile_b,Din)@(Din,2*Dout)
    h01 = jnp.dot(x_ref[...], w01_ref[...], preferred_element_type=jnp.float32)
    ss01 = _select_domain_rows(dom, tbl_ref, 0, 4 * dout, n_domain)
    a01 = _leaky(h01 * ss01[:, :2 * dout] + ss01[:, 2 * dout:])
    identity = a01[:, :dout]               # trans(x)
    a1 = a01[:, dout:]                      # net[0](x)

    # --- stage 2: net[1](net[0](x)) ; stage-local DSBN select (short live range)
    h2 = jnp.dot(a1.astype(w2_ref.dtype), w2_ref[...],
                 preferred_element_type=jnp.float32)
    ss2 = _select_domain_rows(dom, tbl_ref, 4 * dout, 2 * dout, n_domain)
    a2 = _leaky(h2 * ss2[:, :dout] + ss2[:, dout:])

    # --- out = act(identity + net(x)), single cast at the store
    o_ref[...] = _leaky(identity + a2).astype(o_ref.dtype)


def _fold_dsbn(p):
    """Fold Linear bias + eval-mode domain BatchNorm1d into per-domain scale/shift."""
    inv = p["gamma"] / jnp.sqrt(p["var"] + BN_EPS)               # (n_domain, D)
    scale = inv
    shift = (p["b"][None, :] - p["mean"]) * inv + p["beta"]      # (n_domain, D)
    return scale, shift


def _choose_batch_tile(B, tile_b_max):
    """Pick a batch tile that divides B when possible (avoids a full jnp.pad
    copy of x). Prefers an even grid-step count >= 2 so the "parallel" batch
    axis shards across both TensorCores on v7x; falls back to the largest
    divisor, and only pads when B has no usable multiple-of-8 divisor."""
    tile_b_max = max(8, (tile_b_max // 8) * 8)
    limit = min(tile_b_max, (B // 8) * 8)
    best_any = best_even = 0
    for t in range(8, limit + 1, 8):
        if B % t == 0:
            best_any = t
            if (B // t) % 2 == 0:
                best_even = t
    best = best_even or best_any
    if best:
        return best, B                       # no padding needed
    tile = min(tile_b_max, max(8, pl.cdiv(B, 8) * 8))
    return tile, pl.cdiv(B, tile) * tile     # rare: pad (one extra copy of x)


def residual_layer_forward(x, params, domain_idx, *, tile_b=512,
                           out_dtype=jnp.bfloat16, weight_buffers=None):
    """Fused eval-mode ResidualLayer forward.

    tile_b:         max batch tile (primary tuning knob; sweep 256-1024,
                    up to 2048 on v6e's 128 MiB VMEM).
    out_dtype:      bf16 by default (halves output HBM bytes on a memory-bound
                    kernel). Pass x.dtype for full-f32 output parity.
    weight_buffers: set to 1 on v7x at production-size Dout to single-buffer
                    the grid-invariant weight/table blocks (pl.Buffered(1));
                    default None keeps Pallas' standard double buffering.
    """
    B, Din = x.shape
    Dout = params["trans"]["w"].shape[1]
    n_domain = params["trans"]["gamma"].shape[0]

    # Lane-dense output: pad Dout to a multiple of 128 (weights/tables are
    # zero-padded so padded columns are exactly zero and sliced off at the end).
    Dout_pad = pl.cdiv(Dout, 128) * 128

    # ---- parameter prep (plain-JAX glue) ------------------------------------
    s_t, sh_t = _fold_dsbn(params["trans"])
    s_0, sh_0 = _fold_dsbn(params["net0"])
    s_1, sh_1 = _fold_dsbn(params["net1"])

    def padc(a):  # zero-pad the last dim to Dout_pad
        pad = Dout_pad - a.shape[-1]
        return a if pad == 0 else jnp.pad(a, ((0, 0), (0, pad)))

    # Fused first-stage weights: [W_trans | W_net0] -> (Din, 2*Dout_pad), bf16.
    w01 = jnp.concatenate([padc(params["trans"]["w"]), padc(params["net0"]["w"])],
                          axis=1).astype(jnp.bfloat16)
    w2 = padc(params["net1"]["w"])                                 # (Dout, Dout_pad)
    if w2.shape[0] != Dout_pad:
        w2 = jnp.pad(w2, ((0, Dout_pad - w2.shape[0]), (0, 0)))
    w2 = w2.astype(jnp.bfloat16)                                   # (Dout_pad, Dout_pad)

    # Per-domain table: [scale_t|scale_0 | shift_t|shift_0 | scale_1 | shift_1].
    tbl = jnp.concatenate([padc(s_t), padc(s_0), padc(sh_t), padc(sh_0),
                           padc(s_1), padc(sh_1)],
                          axis=1).astype(jnp.float32)              # (n_domain, 6*Dout_pad)

    # ---- batch tiling (avoid the wrapper-side full jnp.pad of x when possible)
    tile_b, B_pad = _choose_batch_tile(B, tile_b)
    dom = domain_idx.astype(jnp.int32).reshape(B, 1)
    if B_pad != B:
        x = jnp.pad(x, ((0, B_pad - B), (0, 0)))
        dom = jnp.pad(dom, ((0, B_pad - B), (0, 0)))
    x_bf16 = x.astype(jnp.bfloat16)

    grid = (B_pad // tile_b,)

    # Grid-invariant residents (constant index maps). Optionally single-buffer.
    resident = (dict(pipeline_mode=pl.Buffered(weight_buffers))
                if weight_buffers is not None else {})
    in_specs = [
        pl.BlockSpec((tile_b, 1), lambda i: (i, 0)),                     # domain idx (int32)
        pl.BlockSpec((tile_b, Din), lambda i: (i, 0)),                   # x tile (bf16)
        pl.BlockSpec((Din, 2 * Dout_pad), lambda i: (0, 0), **resident),  # [W_trans|W_net0]
        pl.BlockSpec((Dout_pad, Dout_pad), lambda i: (0, 0), **resident),  # W_net1
        pl.BlockSpec((n_domain, 6 * Dout_pad), lambda i: (0, 0), **resident),  # DSBN tables
    ]
    out_spec = pl.BlockSpec((tile_b, Dout_pad), lambda i: (i, 0))        # lane-dense output

    # Explicit scoped-VMEM budget (binding on v7x: 64 MiB physical VMEM).
    out_bytes = np.dtype(out_dtype).itemsize
    wb = weight_buffers if weight_buffers is not None else 2
    est = (2 * tile_b * (Din * 2 + 4 + Dout_pad * out_bytes)             # streamed blocks (x, dom, out)
           + wb * (Din * 2 * Dout_pad * 2 + Dout_pad * Dout_pad * 2
                   + n_domain * 6 * Dout_pad * 4)                        # resident weights/tables
           + 6 * tile_b * Dout_pad * 4)                                  # f32 intermediates headroom
    vmem_limit = int(min(64 * 2**20, max(2 * est + 4 * 2**20, 16 * 2**20)))

    # Advisory cost estimate so XLA schedules around the call when stacked.
    flops = 2 * B_pad * (Din * 2 * Dout_pad + Dout_pad * Dout_pad) + 12 * B_pad * Dout_pad
    bytes_accessed = (B_pad * (Din * 2 + 4 + Dout_pad * out_bytes)
                      + Din * 2 * Dout_pad * 2 + Dout_pad * Dout_pad * 2
                      + n_domain * 6 * Dout_pad * 4)

    out = pl.pallas_call(
        functools.partial(residual_layer_kernel, n_domain=n_domain),
        out_shape=jax.ShapeDtypeStruct((B_pad, Dout_pad), out_dtype),
        grid_spec=pltpu.PrefetchScalarGridSpec(
            num_scalar_prefetch=0,
            grid=grid,
            in_specs=in_specs,
            out_specs=out_spec,
        ),
        compiler_params=pltpu.CompilerParams(
            dimension_semantics=("parallel",),
            vmem_limit_bytes=vmem_limit),
        cost_estimate=pl.CostEstimate(flops=flops, transcendentals=0,
                                      bytes_accessed=bytes_accessed),
    )(dom, x_bf16, w01, w2, tbl)

    if B_pad != B or Dout_pad != Dout:
        out = out[:B, :Dout]
    return out


# ------------------------------- demo / check --------------------------------

def _init_embedding_params(key, din, dout, n_domain):
    ks = jax.random.split(key, 6)
    bound = 1.0 / jnp.sqrt(din)
    return {
        "w": jax.random.uniform(ks[0], (din, dout), jnp.float32, -bound, bound),
        "b": jax.random.uniform(ks[1], (dout,), jnp.float32, -bound, bound),
        "gamma": jax.random.uniform(ks[2], (n_domain, dout), jnp.float32, 0.5, 1.5),
        "beta": 0.1 * jax.random.normal(ks[3], (n_domain, dout), jnp.float32),
        "mean": 0.1 * jax.random.normal(ks[4], (n_domain, dout), jnp.float32),
        "var": jax.random.uniform(ks[5], (n_domain, dout), jnp.float32, 0.5, 1.5),
    }


def _reference_forward(x, params, domain_idx, out_dtype):
    """Pure-JAX reference using the same bf16 matmul operands (un-folded BN)."""
    def emb(name, h):
        p = params[name]
        z = jnp.dot(h.astype(jnp.bfloat16), p["w"].astype(jnp.bfloat16),
                    preferred_element_type=jnp.float32) + p["b"][None, :]
        inv = p["gamma"] / jnp.sqrt(p["var"] + BN_EPS)
        y = (z - p["mean"][domain_idx]) * inv[domain_idx] + p["beta"][domain_idx]
        return _leaky(y)

    identity = emb("trans", x)
    h = emb("net0", x)
    h = emb("net1", h)
    return _leaky(identity + h).astype(out_dtype)


if __name__ == "__main__":
    B, DIN, DOUT, N_DOMAIN = 256, 64, 128, 3

    key = jax.random.PRNGKey(0)
    kx, kd, kt, k0, k1 = jax.random.split(key, 5)

    x = jax.random.normal(kx, (B, DIN), jnp.float32)
    domain_idx = jax.random.randint(kd, (B,), 0, N_DOMAIN)

    params = {
        "trans": _init_embedding_params(kt, DIN, DOUT, N_DOMAIN),
        "net0": _init_embedding_params(k0, DIN, DOUT, N_DOMAIN),
        "net1": _init_embedding_params(k1, DOUT, DOUT, N_DOMAIN),
    }

    out = jax.block_until_ready(residual_layer_forward(x, params, domain_idx))

    ref = _reference_forward(x, params, domain_idx, jnp.float32)
    assert out.shape == (B, DOUT)
    assert jnp.allclose(out.astype(jnp.float32), ref, atol=5e-2, rtol=5e-2), \
        "mismatch vs reference"

    print("KERNEL_OK")
</pallas_src>

<mosaic_0001>
module attributes {stable_mosaic.version = 11 : i64} {
  func.func @residual_layer_kernel(%arg0: i32, %arg1: memref<128x1xi32, #tpu.memory_space<vmem>>, %arg2: memref<128x64xbf16, #tpu.memory_space<vmem>>, %arg3: memref<64x256xbf16, #tpu.memory_space<vmem>>, %arg4: memref<128x128xbf16, #tpu.memory_space<vmem>>, %arg5: memref<3x768xf32, #tpu.memory_space<vmem>>, %arg6: memref<128x128xbf16, #tpu.memory_space<vmem>>) attributes {dimension_semantics = [#tpu.dimension_semantics<parallel>], iteration_bounds = array<i64: 2>, scalar_prefetch = 0 : i64, scratch_operands = 0 : i64, tpu.core_type = #tpu.core_type<tc>, window_params = [{transform_indices = @transform_0, window_bounds = array<i64: 128, 1>}, {transform_indices = @transform_1, window_bounds = array<i64: 128, 64>}, {pipeline_mode = #tpu.pipeline_mode<synchronous>, transform_indices = @transform_2, window_bounds = array<i64: 64, 256>}, {pipeline_mode = #tpu.pipeline_mode<synchronous>, transform_indices = @transform_3, window_bounds = array<i64: 128, 128>}, {pipeline_mode = #tpu.pipeline_mode<synchronous>, transform_indices = @transform_4, window_bounds = array<i64: 3, 768>}, {transform_indices = @transform_5, window_bounds = array<i64: 128, 128>}]} {
    %c0 = arith.constant 0 : index
    %c0_0 = arith.constant 0 : index
    %0 = vector.load %arg1[%c0, %c0_0] : memref<128x1xi32, #tpu.memory_space<vmem>>, vector<128x1xi32>
    %c0_1 = arith.constant 0 : index
    %c0_2 = arith.constant 0 : index
    %1 = vector.load %arg2[%c0_1, %c0_2] : memref<128x64xbf16, #tpu.memory_space<vmem>>, vector<128x64xbf16>
    %c0_3 = arith.constant 0 : index
    %c0_4 = arith.constant 0 : index
    %2 = vector.load %arg3[%c0_3, %c0_4] : memref<64x256xbf16, #tpu.memory_space<vmem>>, vector<64x256xbf16>
    %cst = arith.constant dense<0.000000e+00> : vector<128x256xf32>
    %3 = tpu.matmul %1, %2, %cst {dimension_numbers = #tpu.dot_dimension_numbers<[1], [0], [0], [1], [0, 0, 1, 1], [], []>} : vector<128x64xbf16>, vector<64x256xbf16>, vector<128x256xf32> -> vector<128x256xf32>
    %c0_5 = arith.constant 0 : index
    %c0_6 = arith.constant 0 : index
    %4 = vector.load %arg5[%c0_5, %c0_6] : memref<3x768xf32, #tpu.memory_space<vmem>>, vector<1x512xf32>
    %5 = vector.shape_cast %4 : vector<1x512xf32> to vector<512xf32>
    %6 = vector.shape_cast %5 : vector<512xf32> to vector<1x512xf32>
    %7 = vector.shape_cast %6 : vector<1x512xf32> to vector<1x512xf32>
    %8 = vector.broadcast %7 : vector<1x512xf32> to vector<128x512xf32>
    %c1 = arith.constant 1 : index
    %c0_7 = arith.constant 0 : index
    %9 = vector.load %arg5[%c1, %c0_7] : memref<3x768xf32, #tpu.memory_space<vmem>>, vector<1x512xf32>
    %10 = vector.shape_cast %9 : vector<1x512xf32> to vector<512xf32>
    %11 = vector.shape_cast %10 : vector<512xf32> to vector<1x512xf32>
    %c1_i32 = arith.constant 1 : i32
    %12 = vector.broadcast %c1_i32 : i32 to vector<128x1xi32>
    %13 = arith.cmpi eq, %0, %12 : vector<128x1xi32>
    %14 = vector.shape_cast %13 : vector<128x1xi1> to vector<128x1xi1>
    %15 = vector.broadcast %14 : vector<128x1xi1> to vector<128x512xi1>
    %16 = vector.shape_cast %11 : vector<1x512xf32> to vector<1x512xf32>
    %17 = vector.broadcast %16 : vector<1x512xf32> to vector<128x512xf32>
    %18 = arith.select %15, %17, %8 : vector<128x512xi1>, vector<128x512xf32>
    %c2 = arith.constant 2 : index
    %c0_8 = arith.constant 0 : index
    %19 = vector.load %arg5[%c2, %c0_8] : memref<3x768xf32, #tpu.memory_space<vmem>>, vector<1x512xf32>
    %20 = vector.shape_cast %19 : vector<1x512xf32> to vector<512xf32>
    %21 = vector.shape_cast %20 : vector<512xf32> to vector<1x512xf32>
    %c2_i32 = arith.constant 2 : i32
    %22 = vector.broadcast %c2_i32 : i32 to vector<128x1xi32>
    %23 = arith.cmpi eq, %0, %22 : vector<128x1xi32>
    %24 = vector.shape_cast %23 : vector<128x1xi1> to vector<128x1xi1>
    %25 = vector.broadcast %24 : vector<128x1xi1> to vector<128x512xi1>
    %26 = vector.shape_cast %21 : vector<1x512xf32> to vector<1x512xf32>
    %27 = vector.broadcast %26 : vector<1x512xf32> to vector<128x512xf32>
    %28 = arith.select %25, %27, %18 : vector<128x512xi1>, vector<128x512xf32>
    %29 = vector.extract_strided_slice %28 {offsets = [0, 0], sizes = [128, 256], strides = [1, 1]} : vector<128x512xf32> to vector<128x256xf32>
    %30 = arith.mulf %3, %29 : vector<128x256xf32>
    %31 = vector.extract_strided_slice %28 {offsets = [0, 256], sizes = [128, 256], strides = [1, 1]} : vector<128x512xf32> to vector<128x256xf32>
    %32 = arith.addf %30, %31 : vector<128x256xf32>
    %cst_9 = arith.constant 0.000000e+00 : f32
    %33 = vector.broadcast %cst_9 : f32 to vector<128x256xf32>
    %34 = arith.cmpf ogt, %32, %33 : vector<128x256xf32>
    %cst_10 = arith.constant 0.00999999977 : f32
    %35 = vector.broadcast %cst_10 : f32 to vector<128x256xf32>
    %36 = arith.mulf %35, %32 : vector<128x256xf32>
    %37 = arith.select %34, %32, %36 : vector<128x256xi1>, vector<128x256xf32>
    %38 = vector.extract_strided_slice %37 {offsets = [0, 0], sizes = [128, 128], strides = [1, 1]} : vector<128x256xf32> to vector<128x128xf32>
    %39 = vector.extract_strided_slice %37 {offsets = [0, 128], sizes = [128, 128], strides = [1, 1]} : vector<128x256xf32> to vector<128x128xf32>
    %40 = arith.truncf %39 : vector<128x128xf32> to vector<128x128xbf16>
    %c0_11 = arith.constant 0 : index
    %c0_12 = arith.constant 0 : index
    %41 = vector.load %arg4[%c0_11, %c0_12] : memref<128x128xbf16, #tpu.memory_space<vmem>>, vector<128x128xbf16>
    %cst_13 = arith.constant dense<0.000000e+00> : vector<128x128xf32>
    %42 = tpu.matmul %40, %41, %cst_13 {dimension_numbers = #tpu.dot_dimension_numbers<[1], [0], [0], [1], [0, 0, 1, 1], [], []>} : vector<128x128xbf16>, vector<128x128xbf16>, vector<128x128xf32> -> vector<128x128xf32>
    %c0_14 = arith.constant 0 : index
    %c512 = arith.constant 512 : index
    %43 = vector.load %arg5[%c0_14, %c512] : memref<3x768xf32, #tpu.memory_space<vmem>>, vector<1x256xf32>
    %44 = vector.shape_cast %43 : vector<1x256xf32> to vector<256xf32>
    %45 = vector.shape_cast %44 : vector<256xf32> to vector<1x256xf32>
    %46 = vector.shape_cast %45 : vector<1x256xf32> to vector<1x256xf32>
    %47 = vector.broadcast %46 : vector<1x256xf32> to vector<128x256xf32>
    %c1_15 = arith.constant 1 : index
    %c512_16 = arith.constant 512 : index
    %48 = vector.load %arg5[%c1_15, %c512_16] : memref<3x768xf32, #tpu.memory_space<vmem>>, vector<1x256xf32>
    %49 = vector.shape_cast %48 : vector<1x256xf32> to vector<256xf32>
    %50 = vector.shape_cast %49 : vector<256xf32> to vector<1x256xf32>
    %c1_i32_17 = arith.constant 1 : i32
    %51 = vector.broadcast %c1_i32_17 : i32 to vector<128x1xi32>
    %52 = arith.cmpi eq, %0, %51 : vector<128x1xi32>
    %53 = vector.shape_cast %52 : vector<128x1xi1> to vector<128x1xi1>
    %54 = vector.broadcast %53 : vector<128x1xi1> to vector<128x256xi1>
    %55 = vector.shape_cast %50 : vector<1x256xf32> to vector<1x256xf32>
    %56 = vector.broadcast %55 : vector<1x256xf32> to vector<128x256xf32>
    %57 = arith.select %54, %56, %47 : vector<128x256xi1>, vector<128x256xf32>
    %c2_18 = arith.constant 2 : index
    %c512_19 = arith.constant 512 : index
    %58 = vector.load %arg5[%c2_18, %c512_19] : memref<3x768xf32, #tpu.memory_space<vmem>>, vector<1x256xf32>
    %59 = vector.shape_cast %58 : vector<1x256xf32> to vector<256xf32>
    %60 = vector.shape_cast %59 : vector<256xf32> to vector<1x256xf32>
    %c2_i32_20 = arith.constant 2 : i32
    %61 = vector.broadcast %c2_i32_20 : i32 to vector<128x1xi32>
    %62 = arith.cmpi eq, %0, %61 : vector<128x1xi32>
    %63 = vector.shape_cast %62 : vector<128x1xi1> to vector<128x1xi1>
    %64 = vector.broadcast %63 : vector<128x1xi1> to vector<128x256xi1>
    %65 = vector.shape_cast %60 : vector<1x256xf32> to vector<1x256xf32>
    %66 = vector.broadcast %65 : vector<1x256xf32> to vector<128x256xf32>
    %67 = arith.select %64, %66, %57 : vector<128x256xi1>, vector<128x256xf32>
    %68 = vector.extract_strided_slice %67 {offsets = [0, 0], sizes = [128, 128], strides = [1, 1]} : vector<128x256xf32> to vector<128x128xf32>
    %69 = arith.mulf %42, %68 : vector<128x128xf32>
    %70 = vector.extract_strided_slice %67 {offsets = [0, 128], sizes = [128, 128], strides = [1, 1]} : vector<128x256xf32> to vector<128x128xf32>
    %71 = arith.addf %69, %70 : vector<128x128xf32>
    %cst_21 = arith.constant 0.000000e+00 : f32
    %72 = vector.broadcast %cst_21 : f32 to vector<128x128xf32>
    %73 = arith.cmpf ogt, %71, %72 : vector<128x128xf32>
    %cst_22 = arith.constant 0.00999999977 : f32
    %74 = vector.broadcast %cst_22 : f32 to vector<128x128xf32>
    %75 = arith.mulf %74, %71 : vector<128x128xf32>
    %76 = arith.select %73, %71, %75 : vector<128x128xi1>, vector<128x128xf32>
    %77 = arith.addf %38, %76 : vector<128x128xf32>
    %cst_23 = arith.constant 0.000000e+00 : f32
    %78 = vector.broadcast %cst_23 : f32 to vector<128x128xf32>
    %79 = arith.cmpf ogt, %77, %78 : vector<128x128xf32>
    %cst_24 = arith.constant 0.00999999977 : f32
    %80 = vector.broadcast %cst_24 : f32 to vector<128x128xf32>
    %81 = arith.mulf %80, %77 : vector<128x128xf32>
    %82 = arith.select %79, %77, %81 : vector<128x128xi1>, vector<128x128xf32>
    %83 = arith.truncf %82 : vector<128x128xf32> to vector<128x128xbf16>
    %c0_25 = arith.constant 0 : index
    %c0_26 = arith.constant 0 : index
    %84 = vector.load %arg6[%c0_25, %c0_26] : memref<128x128xbf16, #tpu.memory_space<vmem>>, vector<128x128xbf16>
    tpu.vector_store %arg6[%c0_25, %c0_26], %83 {strides = array<i32>} : memref<128x128xbf16, #tpu.memory_space<vmem>>, vector<128x128xbf16>,
    return
  }
  func.func @transform_0(%arg0: i32) -> (i32, i32) {
    %c0_i32 = arith.constant 0 : i32
    %c0_i32_0 = arith.constant 0 : i32
    return %arg0, %c0_i32 : i32, i32
  }
  func.func @transform_1(%arg0: i32) -> (i32, i32) {
    %c0_i32 = arith.constant 0 : i32
    %c0_i32_0 = arith.constant 0 : i32
    return %arg0, %c0_i32 : i32, i32
  }
  func.func @transform_2(%arg0: i32) -> (i32, i32) {
    %c0_i32 = arith.constant 0 : i32
    %c0_i32_0 = arith.constant 0 : i32
    %c0_i32_1 = arith.constant 0 : i32
    return %c0_i32, %c0_i32_0 : i32, i32
  }
  func.func @transform_3(%arg0: i32) -> (i32, i32) {
    %c0_i32 = arith.constant 0 : i32
    %c0_i32_0 = arith.constant 0 : i32
    %c0_i32_1 = arith.constant 0 : i32
    return %c0_i32, %c0_i32_0 : i32, i32
  }
  func.func @transform_4(%arg0: i32) -> (i32, i32) {
    %c0_i32 = arith.constant 0 : i32
    %c0_i32_0 = arith.constant 0 : i32
    %c0_i32_1 = arith.constant 0 : i32
    return %c0_i32, %c0_i32_0 : i32, i32
  }
  func.func @transform_5(%arg0: i32) -> (i32, i32) {
    %c0_i32 = arith.constant 0 : i32
    %c0_i32_0 = arith.constant 0 : i32
    return %arg0, %c0_i32 : i32, i32
  }
}

</mosaic_0001>

<llo_original>
// kernel: tpu_custom_call.1
$region0: #{tpu_custom_call.1}
  #allocation0 [shape = 'u32[]', space=smem, size = 0x4, offset = 0x4, fixed_abs, tag = 'smem constant byte address 0x4 - core index']
  #allocation1 [shape = 'u32[144,128]{1,0:T(1,128)}', space=vmem, size = 0x12000, scoped, tag = 'internal scratch']
  %s0 = inlined_call_operand.vmem [shape: s32[256,1], index: 0, kind: input, shape index: {}]
  %s1 = inlined_call_operand.vmem [shape: bf16[256,64], index: 1, kind: input, shape index: {}]
  %s2 = inlined_call_operand.vmem [shape: bf16[64,256], index: 2, kind: input, shape index: {}]
  %s3 = inlined_call_operand.vmem [shape: bf16[128,128], index: 3, kind: input, shape index: {}]
  %s4 = inlined_call_operand.vmem [shape: f32[3,768], index: 4, kind: input, shape index: {}]
  %s5 = inlined_call_operand.hbm [shape: bf16[256,128], index: 5, kind: output, shape index: {}]
  %s6 = sld [smem:[#allocation0]]
  $region53: #{tpu_custom_call.1} parent=0
    _
  %s8 = ssub.s32 1, %s6
  %s9 = scalar_select 0, %s8, %s6
  $region1: #{tpu_custom_call.1} parent=0
    #allocation2 [shape = 'u8[65536]{0}', space=vmem, size = 0x10000, scoped, tag = 'output window, operand 0']
    #allocation3 [shape = 's32[2]{0}', space=sflag, size = 0x8, scoped, tag = 'scoped memory for tpu_custom_call.1']
    %10 = vsyncpa [#allocation3], 0
    %s11 = scalar_lea.sflag [#allocation3], 1
    %12 = vsyncpa %s11, 0
    loop: start=0, step=1, limit=4
    $region2: #{tpu_custom_call.1} parent=1 // loop_pre_header
      _
    $region3: #{tpu_custom_call.1} parent=1 // loop_header
      %s14 = sphi 0, %s18
      %p15 = scmp.ge.s32.totalorder %s14, 4
      %s24 = sphi 0, %s26
      %s27 = sphi 0, %s24
      %s28 = sphi 0, %s27
      %s44 = sphi 0, %s28
      %s50 = sphi 0, %s52
      %s53 = sphi 0, %s50
      %s54 = sphi 0, %s53
      %s70 = sphi 0, %s54
      %s74 = sphi 0, %s74
      %s76 = sphi 0, %s74
      %s77 = sphi 0, %s76
      %s91 = sphi 0, %s77
      %s95 = sphi 0, %s95
      %s97 = sphi 0, %s95
      %s98 = sphi 0, %s97
      %s112 = sphi 0, %s98
      %s116 = sphi 0, %s116
      %s118 = sphi 0, %s116
      %s119 = sphi 0, %s118
      %s133 = sphi 0, %s119
      %s139 = sphi 0, %s141
      %s142 = sphi 0, %s139
      %s143 = sphi 0, %s142
      %s159 = sphi 0, %s143
    $region4: #{tpu_custom_call.1} parent=1 // loop_header_branch
      %17 = sbr.rel (%p15) target = $region8
    $region5: #{tpu_custom_call.1} parent=1 // loop_body
      %s19 = ssub.s32 %s14, 1
      %s20 = ssub.s32 %s14, 2
      %s21 = sadd.s32 %s14, 1
      %s22 = ssub.s32 %s14, %s21
      %p23 = scmp.eq.s32.totalorder %s22, 0
      %s25 = sadd.s32 %s24, 1
      %s26 = scalar_select %p23, %s24, %s25
      %p29 = pneg %p23
      %p30 = scmp.eq.s32.totalorder %s14, 1
      %p31 = por %p29, %p30
      %p32 = scmp.ne.s32.totalorder %s24, %s27
      %p33 = scmp.eq.s32.totalorder %s14, 0
      %p34 = por %p32, %p33
      %p35 = scmp.ne.s32.totalorder %s24, %s27
      %p36 = scmp.eq.s32.totalorder %s19, 1
      %p37 = por %p35, %p36
      %p38 = scmp.ne.s32.totalorder %s27, %s28
      %p39 = scmp.eq.s32.totalorder %s19, 0
      %p40 = por %p38, %p39
      %p41 = scmp.ne.s32.totalorder %s27, %s28
      %p42 = scmp.eq.s32.totalorder %s20, 1
      %p43 = por %p41, %p42
      %p45 = scmp.ne.s32.totalorder %s28, %s44
      %p46 = scmp.eq.s32.totalorder %s20, 0
      %p47 = por %p45, %p46
      %s48 = ssub.s32 %s14, %s21
      %p49 = scmp.eq.s32.totalorder %s48, 0
      %s51 = sadd.s32 %s50, 1
      %s52 = scalar_select %p49, %s50, %s51
      %p55 = pneg %p49
      %p56 = scmp.eq.s32.totalorder %s14, 1
      %p57 = por %p55, %p56
      %p58 = scmp.ne.s32.totalorder %s50, %s53
      %p59 = scmp.eq.s32.totalorder %s14, 0
      %p60 = por %p58, %p59
      %p61 = scmp.ne.s32.totalorder %s50, %s53
      %p62 = scmp.eq.s32.totalorder %s19, 1
      %p63 = por %p61, %p62
      %p64 = scmp.ne.s32.totalorder %s53, %s54
      %p65 = scmp.eq.s32.totalorder %s19, 0
      %p66 = por %p64, %p65
      %p67 = scmp.ne.s32.totalorder %s53, %s54
      %p68 = scmp.eq.s32.totalorder %s20, 1
      %p69 = por %p67, %p68
      %p71 = scmp.ne.s32.totalorder %s54, %s70
      %p72 = scmp.eq.s32.totalorder %s20, 0
      %p73 = por %p71, %p72
      %s75 = sadd.s32 %s74, 1
      %p78 = scmp.eq.s32.totalorder %s14, 1
      %p79 = scmp.ne.s32.totalorder %s74, %s76
      %p80 = scmp.eq.s32.totalorder %s14, 0
      %p81 = por %p79, %p80
      %p82 = scmp.ne.s32.totalorder %s74, %s76
      %p83 = scmp.eq.s32.totalorder %s19, 1
      %p84 = por %p82, %p83
      %p85 = scmp.ne.s32.totalorder %s76, %s77
      %p86 = scmp.eq.s32.totalorder %s19, 0
      %p87 = por %p85, %p86
      %p88 = scmp.ne.s32.totalorder %s76, %s77
      %p89 = scmp.eq.s32.totalorder %s20, 1
      %p90 = por %p88, %p89
      %p92 = scmp.ne.s32.totalorder %s77, %s91
      %p93 = scmp.eq.s32.totalorder %s20, 0
      %p94 = por %p92, %p93
      %s96 = sadd.s32 %s95, 1
      %p99 = scmp.eq.s32.totalorder %s14, 1
      %p100 = scmp.ne.s32.totalorder %s95, %s97
      %p101 = scmp.eq.s32.totalorder %s14, 0
      %p102 = por %p100, %p101
      %p103 = scmp.ne.s32.totalorder %s95, %s97
      %p104 = scmp.eq.s32.totalorder %s19, 1
      %p105 = por %p103, %p104
      %p106 = scmp.ne.s32.totalorder %s97, %s98
      %p107 = scmp.eq.s32.totalorder %s19, 0
      %p108 = por %p106, %p107
      %p109 = scmp.ne.s32.totalorder %s97, %s98
      %p110 = scmp.eq.s32.totalorder %s20, 1
      %p111 = por %p109, %p110
      %p113 = scmp.ne.s32.totalorder %s98, %s112
      %p114 = scmp.eq.s32.totalorder %s20, 0
      %p115 = por %p113, %p114
      %s117 = sadd.s32 %s116, 1
      %p120 = scmp.eq.s32.totalorder %s14, 1
      %p121 = scmp.ne.s32.totalorder %s116, %s118
      %p122 = scmp.eq.s32.totalorder %s14, 0
      %p123 = por %p121, %p122
      %p124 = scmp.ne.s32.totalorder %s116, %s118
      %p125 = scmp.eq.s32.totalorder %s19, 1
      %p126 = por %p124, %p125
      %p127 = scmp.ne.s32.totalorder %s118, %s119
      %p128 = scmp.eq.s32.totalorder %s19, 0
      %p129 = por %p127, %p128
      %p130 = scmp.ne.s32.totalorder %s118, %s119
      %p131 = scmp.eq.s32.totalorder %s20, 1
      %p132 = por %p130, %p131
      %p134 = scmp.ne.s32.totalorder %s119, %s133
      %p135 = scmp.eq.s32.totalorder %s20, 0
      %p136 = por %p134, %p135
      %s137 = ssub.s32 %s14, %s21
      %p138 = scmp.eq.s32.totalorder %s137, 0
      %s140 = sadd.s32 %s139, 1
      %s141 = scalar_select %p138, %s139, %s140
      %p144 = pneg %p138
      %p145 = scmp.eq.s32.totalorder %s14, 1
      %p146 = por %p144, %p145
      %p147 = scmp.ne.s32.totalorder %s139, %s142
      %p148 = scmp.eq.s32.totalorder %s14, 0
      %p149 = por %p147, %p148
      %p150 = scmp.ne.s32.totalorder %s139, %s142
      %p151 = scmp.eq.s32.totalorder %s19, 1
      %p152 = por %p150, %p151
      %p153 = scmp.ne.s32.totalorder %s142, %s143
      %p154 = scmp.eq.s32.totalorder %s19, 0
      %p155 = por %p153, %p154
      %p156 = scmp.ne.s32.totalorder %s142, %s143
      %p157 = scmp.eq.s32.totalorder %s20, 1
      %p158 = por %p156, %p157
      %p160 = scmp.ne.s32.totalorder %s143, %s159
      %p161 = scmp.eq.s32.totalorder %s20, 0
      %p162 = por %p160, %p161
      %p163 = scmp.le.s32.totalorder 1, %s14
      %p164 = scmp.lt.s32.totalorder %s14, 3
      %p165 = pnand %p163, %p164
      %p166 = pneg %p165
      // Predicated region
      $region9: #{tpu_custom_call.1} parent=5 // pred_check
        _
      $region10: #{tpu_custom_call.1} parent=5 // pred_check_branch
        %168 = sbr.rel (%p165) target = $region12
      $region11: #{tpu_custom_call.1} parent=5 // pred_region
        %s169 = ssub.s32 %s14, 1
        // Predicated region
        $region13: #{tpu_custom_call.1} parent=11 // pred_check
          %p170 = pneg %p87
        $region14: #{tpu_custom_call.1} parent=11 // pred_check_branch
          %172 = sbr.rel (%p170) target = $region16
        $region15: #{tpu_custom_call.1} parent=11 // pred_region
          _
        $region16: #{tpu_custom_call.1} parent=11 // pred_fallthru
          _
        // Predicated region
        $region17: #{tpu_custom_call.1} parent=11 // pred_check
          %p173 = pneg %p108
        $region18: #{tpu_custom_call.1} parent=11 // pred_check_branch
          %175 = sbr.rel (%p173) target = $region20
        $region19: #{tpu_custom_call.1} parent=11 // pred_region
          _
        $region20: #{tpu_custom_call.1} parent=11 // pred_fallthru
          _
        // Predicated region
        $region21: #{tpu_custom_call.1} parent=11 // pred_check
          %p176 = pneg %p129
        $region22: #{tpu_custom_call.1} parent=11 // pred_check_branch
          %178 = sbr.rel (%p176) target = $region24
        $region23: #{tpu_custom_call.1} parent=11 // pred_region
          _
        $region24: #{tpu_custom_call.1} parent=11 // pred_fallthru
          _
      $region12: #{tpu_custom_call.1} parent=5 // pred_fallthru
        _
      %p179 = scmp.lt.s32.totalorder %s14, 2
      // Predicated region
      $region25: #{tpu_custom_call.1} parent=5 // pred_check
        %p180 = pneg %p179
      $region26: #{tpu_custom_call.1} parent=5 // pred_check_branch
        %182 = sbr.rel (%p180) target = $region28
      $region27: #{tpu_custom_call.1} parent=5 // pred_region
        // Predicated region
        $region29: #{tpu_custom_call.1} parent=27 // pred_check
          %p183 = pneg %p34
        $region30: #{tpu_custom_call.1} parent=27 // pred_check_branch
          %185 = sbr.rel (%p183) target = $region32
        $region31: #{tpu_custom_call.1} parent=27 // pred_region
          %s186 = smul.u32 16, %s14
          %p187 = scmp.lt.s32.totalorder %s186, 31
          %s188 = scalar_select %p187, %s186, 31
          %s189 = smul.addr %s188, 8
          %s190 = scalar_lea.vmem %s0, %s189
          %s191 = smul.u32 16, %s14
        $region32: #{tpu_custom_call.1} parent=27 // pred_fallthru
          _
        // Predicated region
        $region33: #{tpu_custom_call.1} parent=27 // pred_check
          %p192 = pneg %p60
        $region34: #{tpu_custom_call.1} parent=27 // pred_check_branch
          %194 = sbr.rel (%p192) target = $region36
        $region35: #{tpu_custom_call.1} parent=27 // pred_region
          %s195 = smul.u32 16, %s14
          %p196 = scmp.lt.s32.totalorder %s195, 31
          %s197 = scalar_select %p196, %s195, 31
          %s198 = smul.addr %s197, 4
          %s199 = scalar_lea.vmem %s1, %s198
          %s200 = smul.u32 16, %s14
        $region36: #{tpu_custom_call.1} parent=27 // pred_fallthru
          _
      $region28: #{tpu_custom_call.1} parent=5 // pred_fallthru
        _
      %p201 = scmp.le.s32.totalorder 1, %s14
      %p202 = scmp.lt.s32.totalorder %s14, 3
      %p203 = pnand %p201, %p202
      %p204 = pneg %p203
      // Predicated region
      $region37: #{tpu_custom_call.1} parent=5 // pred_check
        _
      $region38: #{tpu_custom_call.1} parent=5 // pred_check_branch
        %206 = sbr.rel (%p203) target = $region40
      $region39: #{tpu_custom_call.1} parent=5 // pred_region
        %s207 = ssub.s32 %s14, 1
        %s208 = smul.u32 16, %s19
        %p209 = scmp.lt.s32.totalorder %s208, 31
        %s210 = scalar_select %p209, %s208, 31
        %s211 = smul.addr %s210, 8
        %s212 = scalar_lea.vmem %s0, %s211
        %p213 = pneg %p40
        %p214 = pneg %p37
        %s215 = smul.u32 16, %s19
        %p216 = scmp.lt.s32.totalorder %s215, 31
        %s217 = scalar_select %p216, %s215, 31
        %s218 = smul.addr %s217, 4
        %s219 = scalar_lea.vmem %s1, %s218
        %p220 = pneg %p66
        %p221 = pneg %p63
        %p222 = pneg %p87
        %p223 = pneg %p84
        %p224 = pneg %p108
        %p225 = pneg %p105
        %p226 = pneg %p129
        %p227 = pneg %p126
        %p228 = pneg %p155
        %p229 = pneg %p152
        %s230 = sand.u32 %s142, 1
        %s231 = scalar_lea.sflag [#allocation3], %s230
        %s232 = sand.u32 %s142, 1
        %s233 = smul.addr %s232, 64
        %s234 = scalar_lea.vmem [#allocation2], %s233
        %s235 = smul.u32 16, %s19
        %p236 = scmp.lt.s32.totalorder %s235, 31
        %s237 = scalar_select %p236, %s235, 31
        %s238 = smul.addr %s237, 8
        %s239 = scalar_lea.vmem %s0, %s238
        %s240 = smul.u32 16, %s19
        %s241 = smul.u32 16, %s19
        %p242 = scmp.lt.s32.totalorder %s241, 31
        %s243 = scalar_select %p242, %s241, 31
        %s244 = smul.addr %s243, 4
        %s245 = scalar_lea.vmem %s1, %s244
        %s246 = smul.u32 16, %s19
        %s247 = smul.u32 16, %s19
        %v249 = vld [vmem:[%s239] sm:$0xff]
        %v250 = vld [vmem:[%s239 + $0x8] sm:$0xff]
        %v251 = vld [vmem:[%s239 + $0x10] sm:$0xff]
        %v252 = vld [vmem:[%s239 + $0x18] sm:$0xff]
        %v253 = vld [vmem:[%s239 + $0x20] sm:$0xff]
        %v254 = vld [vmem:[%s239 + $0x28] sm:$0xff]
        %v255 = vld [vmem:[%s239 + $0x30] sm:$0xff]
        %v256 = vld [vmem:[%s239 + $0x38] sm:$0xff]
        %v257 = vld [vmem:[%s239 + $0x40] sm:$0xff]
        %v258 = vld [vmem:[%s239 + $0x48] sm:$0xff]
        %v259 = vld [vmem:[%s239 + $0x50] sm:$0xff]
        %v260 = vld [vmem:[%s239 + $0x58] sm:$0xff]
        %v261 = vld [vmem:[%s239 + $0x60] sm:$0xff]
        %v262 = vld [vmem:[%s239 + $0x68] sm:$0xff]
        %v263 = vld [vmem:[%s239 + $0x70] sm:$0xff]
        %v264 = vld [vmem:[%s239 + $0x78] sm:$0xff]
        %v265 = vld [vmem:[%s245] sm:$0xf]
        %v266 = vld [vmem:[%s245 + $0x4] sm:$0xf]
        %v267 = vld [vmem:[%s245 + $0x8] sm:$0xf]
        %v268 = vld [vmem:[%s245 + $0xc] sm:$0xf]
        %v269 = vld [vmem:[%s245 + $0x10] sm:$0xf]
        %v270 = vld [vmem:[%s245 + $0x14] sm:$0xf]
        %v271 = vld [vmem:[%s245 + $0x18] sm:$0xf]
        %v272 = vld [vmem:[%s245 + $0x1c] sm:$0xf]
        %v273 = vld [vmem:[%s245 + $0x20] sm:$0xf]
        %v274 = vld [vmem:[%s245 + $0x24] sm:$0xf]
        %v275 = vld [vmem:[%s245 + $0x28] sm:$0xf]
        %v276 = vld [vmem:[%s245 + $0x2c] sm:$0xf]
        %v277 = vld [vmem:[%s245 + $0x30] sm:$0xf]
        %v278 = vld [vmem:[%s245 + $0x34] sm:$0xf]
        %v279 = vld [vmem:[%s245 + $0x38] sm:$0xf]
        %v280 = vld [vmem:[%s245 + $0x3c] sm:$0xf]
        %v281 = vld [vmem:[%s2] sm:$0xff]
        %v282 = vld [vmem:[%s2 + $0x8] sm:$0xff]
        %v283 = vld [vmem:[%s2 + $0x10] sm:$0xff]
        %v284 = vld [vmem:[%s2 + $0x18] sm:$0xff]
        %v285 = vld [vmem:[%s2 + $0x20] sm:$0xff]
        %v286 = vld [vmem:[%s2 + $0x28] sm:$0xff]
        %v287 = vld [vmem:[%s2 + $0x30] sm:$0xff]
        %v288 = vld [vmem:[%s2 + $0x38] sm:$0xff]
        %v305 = vunpack.c.l.b16 %v265
        %v306 = vunpack.c.l.b16 %v266
        %v307 = vunpack.c.l.b16 %v267
        %v308 = vunpack.c.l.b16 %v268
        %v309 = vunpack.c.l.b16 %v269
        %v310 = vunpack.c.l.b16 %v270
        %v311 = vunpack.c.l.b16 %v271
        %v312 = vunpack.c.l.b16 %v272
        %v313 = vunpack.c.l.b16 %v273
        %v314 = vunpack.c.l.b16 %v274
        %v315 = vunpack.c.l.b16 %v275
        %v316 = vunpack.c.l.b16 %v276
        %v317 = vunpack.c.l.b16 %v277
        %v318 = vunpack.c.l.b16 %v278
        %v319 = vunpack.c.l.b16 %v279
        %v320 = vunpack.c.l.b16 %v280
        %v321 = vpack.c.b16 %v306, %v305
        %v322 = vpack.c.b16 %v308, %v307
        %v323 = vpack.c.b16 %v310, %v309
        %v324 = vpack.c.b16 %v312, %v311
        %v325 = vpack.c.b16 %v314, %v313
        %v326 = vpack.c.b16 %v316, %v315
        %v327 = vpack.c.b16 %v318, %v317
        %v328 = vpack.c.b16 %v320, %v319
        %v337 = vunpack.c.l.b16 %v281
        %v338 = vunpack.c.h.b16 %v281
        %v339 = vunpack.c.l.b16 %v282
        %v340 = vunpack.c.h.b16 %v282
        %v341 = vunpack.c.l.b16 %v283
        %v342 = vunpack.c.h.b16 %v283
        %v343 = vunpack.c.l.b16 %v284
        %v344 = vunpack.c.h.b16 %v284
        %v345 = vunpack.c.l.b16 %v285
        %v346 = vunpack.c.h.b16 %v285
        %v347 = vunpack.c.l.b16 %v286
        %v348 = vunpack.c.h.b16 %v286
        %v349 = vunpack.c.l.b16 %v287
        %v350 = vunpack.c.h.b16 %v287
        %v351 = vunpack.c.l.b16 %v288
        %v352 = vunpack.c.h.b16 %v288
        %v353 = vpack.c.b16 %v339, %v337
        %v354 = vpack.c.b16 %v340, %v338
        %v355 = vpack.c.b16 %v343, %v341
        %v356 = vpack.c.b16 %v344, %v342
        %v357 = vpack.c.b16 %v347, %v345
        %v358 = vpack.c.b16 %v348, %v346
        %v359 = vpack.c.b16 %v351, %v349
        %v360 = vpack.c.b16 %v352, %v350
        %vm369 = vcmask 523264
        %v371 = vsel %vm369, %v321, 0
        %v374 = vsel %vm369, %v322, 0
        %v377 = vsel %vm369, %v323, 0
        %v380 = vsel %vm369, %v324, 0
        %v383 = vsel %vm369, %v325, 0
        %v386 = vsel %vm369, %v326, 0
        %v389 = vsel %vm369, %v327, 0
        %v392 = vsel %vm369, %v328, 0
        %394 = vmatprep.subr.bf16.mxu0 0
        %395 = vmatpush1.bf16.msra.mxu0 0
        %396 = vmatprep.subr.bf16.mxu0 0
        %397 = vmatpush1.bf16.msra.mxu0 0
        %398 = vmatprep.subr.bf16.mxu0 0
        %399 = vmatpush1.bf16.msra.mxu0 0
        %400 = vmatprep.subr.bf16.mxu0 0
        %401 = vmatpush1.bf16.msra.mxu0 0
        %402 = vmatprep.subr.bf16.mxu0 %v360
        %403 = vmatpush1.bf16.msra.mxu0 %v359
        %404 = vmatprep.subr.bf16.mxu0 %v358
        %405 = vmatpush1.bf16.msra.mxu0 %v357
        %406 = vmatprep.subr.bf16.mxu0 %v356
        %407 = vmatpush1.bf16.msra.mxu0 %v355
        %408 = vmatprep.subr.bf16.mxu0 %v354
        %409 = vmatpush1.bf16.msra.mxu0 %v353
        %410 = vmatprep.subr.bf16.mxu0 0
        %411 = vmatpush2.bf16.msra.mxu0 0
        %412 = vmatprep.subr.bf16.mxu0 0
        %413 = vmatpush2.bf16.msra.mxu0 0
        %414 = vmatprep.subr.bf16.mxu0 0
        %415 = vmatpush2.bf16.msra.mxu0 0
        %416 = vmatprep.subr.bf16.mxu0 0
        %417 = vmatpush2.bf16.msra.mxu0 0
        %418 = vmatprep.subr.bf16.mxu0 0
        %419 = vmatpush2.bf16.msra.mxu0 0
        %420 = vmatprep.subr.bf16.mxu0 0
        %421 = vmatpush2.bf16.msra.mxu0 0
        %422 = vmatprep.subr.bf16.mxu0 0
        %423 = vmatpush2.bf16.msra.mxu0 0
        %424 = vmatprep.subr.bf16.mxu0 0
        %425 = vmatpush2.bf16.msra.mxu0 0
        %426 = vmatprep.mubr.bf16.mxu0 0
        %427 = vmatmul.mubr.bf16.gmra.mxu0 %v371
        %v428 = vpop.f32.mrf.mxu0
        %v429 = vadd.f32 0.0, %v428
        %v430 = vpop.f32.mrf.mxu0
        %v431 = vadd.f32 0.0, %v430
        %v432 = vpop.f32.mrf.mxu0
        %v433 = vadd.f32 0.0, %v432
        %v434 = vpop.f32.mrf.mxu0
        %v435 = vadd.f32 0.0, %v434
        %436 = vmatprep.mubr.bf16.mxu0 0
        %437 = vmatmul.mubr.bf16.gmra.mxu0 %v374
        %v438 = vpop.f32.mrf.mxu0
        %v439 = vadd.f32 0.0, %v438
        %v440 = vpop.f32.mrf.mxu0
        %v441 = vadd.f32 0.0, %v440
        %v442 = vpop.f32.mrf.mxu0
        %v443 = vadd.f32 0.0, %v442
        %v444 = vpop.f32.mrf.mxu0
        %v445 = vadd.f32 0.0, %v444
        %446 = vmatprep.mubr.bf16.mxu0 0
        %447 = vmatmul.mubr.bf16.gmra.mxu0 %v377
        %v448 = vpop.f32.mrf.mxu0
        %v449 = vadd.f32 0.0, %v448
        %v450 = vpop.f32.mrf.mxu0
        %v451 = vadd.f32 0.0, %v450
        %v452 = vpop.f32.mrf.mxu0
        %v453 = vadd.f32 0.0, %v452
        %v454 = vpop.f32.mrf.mxu0
        %v455 = vadd.f32 0.0, %v454
        %456 = vmatprep.mubr.bf16.mxu0 0
        %457 = vmatmul.mubr.bf16.gmra.mxu0 %v380
        %v458 = vpop.f32.mrf.mxu0
        %v459 = vadd.f32 0.0, %v458
        %v460 = vpop.f32.mrf.mxu0
        %v461 = vadd.f32 0.0, %v460
        %v462 = vpop.f32.mrf.mxu0
        %v463 = vadd.f32 0.0, %v462
        %v464 = vpop.f32.mrf.mxu0
        %v465 = vadd.f32 0.0, %v464
        %466 = vmatprep.mubr.bf16.mxu0 0
        %467 = vmatmul.mubr.bf16.gmra.mxu0 %v383
        %v468 = vpop.f32.mrf.mxu0
        %v469 = vadd.f32 0.0, %v468
        %v470 = vpop.f32.mrf.mxu0
        %v471 = vadd.f32 0.0, %v470
        %v472 = vpop.f32.mrf.mxu0
        %v473 = vadd.f32 0.0, %v472
        %v474 = vpop.f32.mrf.mxu0
        %v475 = vadd.f32 0.0, %v474
        %476 = vmatprep.mubr.bf16.mxu0 0
        %477 = vmatmul.mubr.bf16.gmra.mxu0 %v386
        %v478 = vpop.f32.mrf.mxu0
        %v479 = vadd.f32 0.0, %v478
        %v480 = vpop.f32.mrf.mxu0
        %v481 = vadd.f32 0.0, %v480
        %v482 = vpop.f32.mrf.mxu0
        %v483 = vadd.f32 0.0, %v482
        %v484 = vpop.f32.mrf.mxu0
        %v485 = vadd.f32 0.0, %v484
        %486 = vmatprep.mubr.bf16.mxu0 0
        %487 = vmatmul.mubr.bf16.gmra.mxu0 %v389
        %v488 = vpop.f32.mrf.mxu0
        %v489 = vadd.f32 0.0, %v488
        %v490 = vpop.f32.mrf.mxu0
        %v491 = vadd.f32 0.0, %v490
        %v492 = vpop.f32.mrf.mxu0
        %v493 = vadd.f32 0.0, %v492
        %v494 = vpop.f32.mrf.mxu0
        %v495 = vadd.f32 0.0, %v494
        %496 = vmatprep.mubr.bf16.mxu0 0
        %497 = vmatmul.mubr.bf16.gmra.mxu0 %v392
        %v498 = vpop.f32.mrf.mxu0
        %v499 = vadd.f32 0.0, %v498
        %v500 = vpop.f32.mrf.mxu0
        %v501 = vadd.f32 0.0, %v500
        %v502 = vpop.f32.mrf.mxu0
        %v503 = vadd.f32 0.0, %v502
        %v504 = vpop.f32.mrf.mxu0
        %v505 = vadd.f32 0.0, %v504
        %506 = vdwg.mxu0
        %v507 = vld [vmem:[%s4] ss:$4 sm:$0xf]
        %v509 = vlaneseq
        %v510 = vshrl.u32 %v509, 7
        %v511 = vsub.s32 0, %v510
        %v512 = vrot.slane %v507, %v511
        %v513 = vlaneseq
        %v514 = vshrl.u32 %v513, 7
        %v515 = vsub.s32 1, %v514
        %v516 = vrot.slane %v507, %v515
        %v517 = vlaneseq
        %v518 = vshrl.u32 %v517, 7
        %v519 = vsub.s32 2, %v518
        %v520 = vrot.slane %v507, %v519
        %v521 = vlaneseq
        %v522 = vshrl.u32 %v521, 7
        %v523 = vsub.s32 3, %v522
        %v524 = vrot.slane %v507, %v523
        %s529 = scalar_lea.vmem %s4, 1
        %v530 = vld [vmem:[%s529] ss:$4 sm:$0xf]
        %vm531 = vcmp.eq.s32.totalorder %v249, 1
        %vm532 = vcmp.eq.s32.totalorder %v250, 1
        %vm533 = vcmp.eq.s32.totalorder %v251, 1
        %vm534 = vcmp.eq.s32.totalorder %v252, 1
        %vm535 = vcmp.eq.s32.totalorder %v253, 1
        %vm536 = vcmp.eq.s32.totalorder %v254, 1
        %vm537 = vcmp.eq.s32.totalorder %v255, 1
        %vm538 = vcmp.eq.s32.totalorder %v256, 1
        %vm539 = vcmp.eq.s32.totalorder %v257, 1
        %vm540 = vcmp.eq.s32.totalorder %v258, 1
        %vm541 = vcmp.eq.s32.totalorder %v259, 1
        %vm542 = vcmp.eq.s32.totalorder %v260, 1
        %vm543 = vcmp.eq.s32.totalorder %v261, 1
        %vm544 = vcmp.eq.s32.totalorder %v262, 1
        %vm545 = vcmp.eq.s32.totalorder %v263, 1
        %vm546 = vcmp.eq.s32.totalorder %v264, 1
        %v547 = vsel %vm531, 1, 0
        %v548 = vsel %vm532, 1, 0
        %v549 = vsel %vm533, 1, 0
        %v550 = vsel %vm534, 1, 0
        %v551 = vsel %vm535, 1, 0
        %v552 = vsel %vm536, 1, 0
        %v553 = vsel %vm537, 1, 0
        %v554 = vsel %vm538, 1, 0
        %v555 = vsel %vm539, 1, 0
        %v556 = vsel %vm540, 1, 0
        %v557 = vsel %vm541, 1, 0
        %v558 = vsel %vm542, 1, 0
        %v559 = vsel %vm543, 1, 0
        %v560 = vsel %vm544, 1, 0
        %v561 = vsel %vm545, 1, 0
        %v562 = vsel %vm546, 1, 0
        %563 = vset.pattern.permute.xlu0 0
        %564 = vperm.xlu0 %563, %v547
        %v565 = vpop.permute.xlu0 %564
        %566 = vset.pattern.permute.xlu0 0
        %567 = vperm.xlu0 %566, %v548
        %v568 = vpop.permute.xlu0 %567
        %569 = vset.pattern.permute.xlu0 0
        %570 = vperm.xlu0 %569, %v549
        %v571 = vpop.permute.xlu0 %570
        %572 = vset.pattern.permute.xlu0 0
        %573 = vperm.xlu0 %572, %v550
        %v574 = vpop.permute.xlu0 %573
        %575 = vset.pattern.permute.xlu0 0
        %576 = vperm.xlu0 %575, %v551
        %v577 = vpop.permute.xlu0 %576
        %578 = vset.pattern.permute.xlu0 0
        %579 = vperm.xlu0 %578, %v552
        %v580 = vpop.permute.xlu0 %579
        %581 = vset.pattern.permute.xlu0 0
        %582 = vperm.xlu0 %581, %v553
        %v583 = vpop.permute.xlu0 %582
        %584 = vset.pattern.permute.xlu0 0
        %585 = vperm.xlu0 %584, %v554
        %v586 = vpop.permute.xlu0 %585
        %587 = vset.pattern.permute.xlu0 0
        %588 = vperm.xlu0 %587, %v555
        %v589 = vpop.permute.xlu0 %588
        %590 = vset.pattern.permute.xlu0 0
        %591 = vperm.xlu0 %590, %v556
        %v592 = vpop.permute.xlu0 %591
        %593 = vset.pattern.permute.xlu0 0
        %594 = vperm.xlu0 %593, %v557
        %v595 = vpop.permute.xlu0 %594
        %596 = vset.pattern.permute.xlu0 0
        %597 = vperm.xlu0 %596, %v558
        %v598 = vpop.permute.xlu0 %597
        %599 = vset.pattern.permute.xlu0 0
        %600 = vperm.xlu0 %599, %v559
        %v601 = vpop.permute.xlu0 %600
        %602 = vset.pattern.permute.xlu0 0
        %603 = vperm.xlu0 %602, %v560
        %v604 = vpop.permute.xlu0 %603
        %605 = vset.pattern.permute.xlu0 0
        %606 = vperm.xlu0 %605, %v561
        %v607 = vpop.permute.xlu0 %606
        %608 = vset.pattern.permute.xlu0 0
        %609 = vperm.xlu0 %608, %v562
        %v610 = vpop.permute.xlu0 %609
        %vm611 = vcmp.eq.s32.totalorder %v565, 1
        %vm612 = vcmp.eq.s32.totalorder %v568, 1
        %vm613 = vcmp.eq.s32.totalorder %v571, 1
        %vm614 = vcmp.eq.s32.totalorder %v574, 1
        %vm615 = vcmp.eq.s32.totalorder %v577, 1
        %vm616 = vcmp.eq.s32.totalorder %v580, 1
        %vm617 = vcmp.eq.s32.totalorder %v583, 1
        %vm618 = vcmp.eq.s32.totalorder %v586, 1
        %vm619 = vcmp.eq.s32.totalorder %v589, 1
        %vm620 = vcmp.eq.s32.totalorder %v592, 1
        %vm621 = vcmp.eq.s32.totalorder %v595, 1
        %vm622 = vcmp.eq.s32.totalorder %v598, 1
        %vm623 = vcmp.eq.s32.totalorder %v601, 1
        %vm624 = vcmp.eq.s32.totalorder %v604, 1
        %vm625 = vcmp.eq.s32.totalorder %v607, 1
        %vm626 = vcmp.eq.s32.totalorder %v610, 1
        %v628 = vlaneseq
        %v629 = vshrl.u32 %v628, 7
        %v630 = vsub.s32 0, %v629
        %v631 = vrot.slane %v530, %v630
        %v632 = vlaneseq
        %v633 = vshrl.u32 %v632, 7
        %v634 = vsub.s32 1, %v633
        %v635 = vrot.slane %v530, %v634
        %v636 = vlaneseq
        %v637 = vshrl.u32 %v636, 7
        %v638 = vsub.s32 2, %v637
        %v639 = vrot.slane %v530, %v638
        %v640 = vlaneseq
        %v641 = vshrl.u32 %v640, 7
        %v642 = vsub.s32 3, %v641
        %v643 = vrot.slane %v530, %v642
        %v648 = vsel %vm611, %v631, %v512
        %v649 = vsel %vm611, %v635, %v516
        %v650 = vsel %vm611, %v639, %v520
        %v651 = vsel %vm611, %v643, %v524
        %v652 = vsel %vm612, %v631, %v512
        %v653 = vsel %vm612, %v635, %v516
        %v654 = vsel %vm612, %v639, %v520
        %v655 = vsel %vm612, %v643, %v524
        %v656 = vsel %vm613, %v631, %v512
        %v657 = vsel %vm613, %v635, %v516
        %v658 = vsel %vm613, %v639, %v520
        %v659 = vsel %vm613, %v643, %v524
        %v660 = vsel %vm614, %v631, %v512
        %v661 = vsel %vm614, %v635, %v516
        %v662 = vsel %vm614, %v639, %v520
        %v663 = vsel %vm614, %v643, %v524
        %v664 = vsel %vm615, %v631, %v512
        %v665 = vsel %vm615, %v635, %v516
        %v666 = vsel %vm615, %v639, %v520
        %v667 = vsel %vm615, %v643, %v524
        %v668 = vsel %vm616, %v631, %v512
        %v669 = vsel %vm616, %v635, %v516
        %v670 = vsel %vm616, %v639, %v520
        %v671 = vsel %vm616, %v643, %v524
        %v672 = vsel %vm617, %v631, %v512
        %v673 = vsel %vm617, %v635, %v516
        %v674 = vsel %vm617, %v639, %v520
        %v675 = vsel %vm617, %v643, %v524
        %v676 = vsel %vm618, %v631, %v512
        %v677 = vsel %vm618, %v635, %v516
        %v678 = vsel %vm618, %v639, %v520
        %v679 = vsel %vm618, %v643, %v524
        %v680 = vsel %vm619, %v631, %v512
        %v681 = vsel %vm619, %v635, %v516
        %v682 = vsel %vm619, %v639, %v520
        %v683 = vsel %vm619, %v643, %v524
        %v684 = vsel %vm620, %v631, %v512
        %v685 = vsel %vm620, %v635, %v516
        %v686 = vsel %vm620, %v639, %v520
        %v687 = vsel %vm620, %v643, %v524
        %v688 = vsel %vm621, %v631, %v512
        %v689 = vsel %vm621, %v635, %v516
        %v690 = vsel %vm621, %v639, %v520
        %v691 = vsel %vm621, %v643, %v524
        %v692 = vsel %vm622, %v631, %v512
        %v693 = vsel %vm622, %v635, %v516
        %v694 = vsel %vm622, %v639, %v520
        %v695 = vsel %vm622, %v643, %v524
        %v696 = vsel %vm623, %v631, %v512
        %v697 = vsel %vm623, %v635, %v516
        %v698 = vsel %vm623, %v639, %v520
        %v699 = vsel %vm623, %v643, %v524
        %v700 = vsel %vm624, %v631, %v512
        %v701 = vsel %vm624, %v635, %v516
        %v702 = vsel %vm624, %v639, %v520
        %v703 = vsel %vm624, %v643, %v524
        %v704 = vsel %vm625, %v631, %v512
        %v705 = vsel %vm625, %v635, %v516
        %v706 = vsel %vm625, %v639, %v520
        %v707 = vsel %vm625, %v643, %v524
        %v708 = vsel %vm626, %v631, %v512
        %v709 = vsel %vm626, %v635, %v516
        %v710 = vsel %vm626, %v639, %v520
        %v711 = vsel %vm626, %v643, %v524
        %s712 = scalar_lea.vmem %s4, 2
        %v713 = vld [vmem:[%s712] ss:$4 sm:$0xf]
        %vm714 = vcmp.eq.s32.totalorder %v249, 2
        %vm715 = vcmp.eq.s32.totalorder %v250, 2
        %vm716 = vcmp.eq.s32.totalorder %v251, 2
        %vm717 = vcmp.eq.s32.totalorder %v252, 2
        %vm718 = vcmp.eq.s32.totalorder %v253, 2
        %vm719 = vcmp.eq.s32.totalorder %v254, 2
        %vm720 = vcmp.eq.s32.totalorder %v255, 2
        %vm721 = vcmp.eq.s32.totalorder %v256, 2
        %vm722 = vcmp.eq.s32.totalorder %v257, 2
        %vm723 = vcmp.eq.s32.totalorder %v258, 2
        %vm724 = vcmp.eq.s32.totalorder %v259, 2
        %vm725 = vcmp.eq.s32.totalorder %v260, 2
        %vm726 = vcmp.eq.s32.totalorder %v261, 2
        %vm727 = vcmp.eq.s32.totalorder %v262, 2
        %vm728 = vcmp.eq.s32.totalorder %v263, 2
        %vm729 = vcmp.eq.s32.totalorder %v264, 2
        %v730 = vsel %vm714, 1, 0
        %v731 = vsel %vm715, 1, 0
        %v732 = vsel %vm716, 1, 0
        %v733 = vsel %vm717, 1, 0
        %v734 = vsel %vm718, 1, 0
        %v735 = vsel %vm719, 1, 0
        %v736 = vsel %vm720, 1, 0
        %v737 = vsel %vm721, 1, 0
        %v738 = vsel %vm722, 1, 0
        %v739 = vsel %vm723, 1, 0
        %v740 = vsel %vm724, 1, 0
        %v741 = vsel %vm725, 1, 0
        %v742 = vsel %vm726, 1, 0
        %v743 = vsel %vm727, 1, 0
        %v744 = vsel %vm728, 1, 0
        %v745 = vsel %vm729, 1, 0
        %746 = vset.pattern.permute.xlu0 0
        %747 = vperm.xlu0 %746, %v730
        %v748 = vpop.permute.xlu0 %747
        %749 = vset.pattern.permute.xlu0 0
        %750 = vperm.xlu0 %749, %v731
        %v751 = vpop.permute.xlu0 %750
        %752 = vset.pattern.permute.xlu0 0
        %753 = vperm.xlu0 %752, %v732
        %v754 = vpop.permute.xlu0 %753
        %755 = vset.pattern.permute.xlu0 0
        %756 = vperm.xlu0 %755, %v733
        %v757 = vpop.permute.xlu0 %756
        %758 = vset.pattern.permute.xlu0 0
        %759 = vperm.xlu0 %758, %v734
        %v760 = vpop.permute.xlu0 %759
        %761 = vset.pattern.permute.xlu0 0
        %762 = vperm.xlu0 %761, %v735
        %v763 = vpop.permute.xlu0 %762
        %764 = vset.pattern.permute.xlu0 0
        %765 = vperm.xlu0 %764, %v736
        %v766 = vpop.permute.xlu0 %765
        %767 = vset.pattern.permute.xlu0 0
        %768 = vperm.xlu0 %767, %v737
        %v769 = vpop.permute.xlu0 %768
        %770 = vset.pattern.permute.xlu0 0
        %771 = vperm.xlu0 %770, %v738
        %v772 = vpop.permute.xlu0 %771
        %773 = vset.pattern.permute.xlu0 0
        %774 = vperm.xlu0 %773, %v739
        %v775 = vpop.permute.xlu0 %774
        %776 = vset.pattern.permute.xlu0 0
        %777 = vperm.xlu0 %776, %v740
        %v778 = vpop.permute.xlu0 %777
        %779 = vset.pattern.permute.xlu0 0
        %780 = vperm.xlu0 %779, %v741
        %v781 = vpop.permute.xlu0 %780
        %782 = vset.pattern.permute.xlu0 0
        %783 = vperm.xlu0 %782, %v742
        %v784 = vpop.permute.xlu0 %783
        %785 = vset.pattern.permute.xlu0 0
        %786 = vperm.xlu0 %785, %v743
        %v787 = vpop.permute.xlu0 %786
        %788 = vset.pattern.permute.xlu0 0
        %789 = vperm.xlu0 %788, %v744
        %v790 = vpop.permute.xlu0 %789
        %791 = vset.pattern.permute.xlu0 0
        %792 = vperm.xlu0 %791, %v745
        %v793 = vpop.permute.xlu0 %792
        %vm794 = vcmp.eq.s32.totalorder %v748, 1
        %vm795 = vcmp.eq.s32.totalorder %v751, 1
        %vm796 = vcmp.eq.s32.totalorder %v754, 1
        %vm797 = vcmp.eq.s32.totalorder %v757, 1
        %vm798 = vcmp.eq.s32.totalorder %v760, 1
        %vm799 = vcmp.eq.s32.totalorder %v763, 1
        %vm800 = vcmp.eq.s32.totalorder %v766, 1
        %vm801 = vcmp.eq.s32.totalorder %v769, 1
        %vm802 = vcmp.eq.s32.totalorder %v772, 1
        %vm803 = vcmp.eq.s32.totalorder %v775, 1
        %vm804 = vcmp.eq.s32.totalorder %v778, 1
        %vm805 = vcmp.eq.s32.totalorder %v781, 1
        %vm806 = vcmp.eq.s32.totalorder %v784, 1
        %vm807 = vcmp.eq.s32.totalorder %v787, 1
        %vm808 = vcmp.eq.s32.totalorder %v790, 1
        %vm809 = vcmp.eq.s32.totalorder %v793, 1
        %v811 = vlaneseq
        %v812 = vshrl.u32 %v811, 7
        %v813 = vsub.s32 0, %v812
        %v814 = vrot.slane %v713, %v813
        %v815 = vlaneseq
        %v816 = vshrl.u32 %v815, 7
        %v817 = vsub.s32 1, %v816
        %v818 = vrot.slane %v713, %v817
        %v819 = vlaneseq
        %v820 = vshrl.u32 %v819, 7
        %v821 = vsub.s32 2, %v820
        %v822 = vrot.slane %v713, %v821
        %v823 = vlaneseq
        %v824 = vshrl.u32 %v823, 7
        %v825 = vsub.s32 3, %v824
        %v826 = vrot.slane %v713, %v825
        %v831 = vsel %vm794, %v814, %v648
        %v832 = vsel %vm794, %v818, %v649
        %v833 = vsel %vm794, %v822, %v650
        %v834 = vsel %vm794, %v826, %v651
        %v835 = vsel %vm795, %v814, %v652
        %v836 = vsel %vm795, %v818, %v653
        %v837 = vsel %vm795, %v822, %v654
        %v838 = vsel %vm795, %v826, %v655
        %v839 = vsel %vm796, %v814, %v656
        %v840 = vsel %vm796, %v818, %v657
        %v841 = vsel %vm796, %v822, %v658
        %v842 = vsel %vm796, %v826, %v659
        %v843 = vsel %vm797, %v814, %v660
        %v844 = vsel %vm797, %v818, %v661
        %v845 = vsel %vm797, %v822, %v662
        %v846 = vsel %vm797, %v826, %v663
        %v847 = vsel %vm798, %v814, %v664
        %v848 = vsel %vm798, %v818, %v665
        %v849 = vsel %vm798, %v822, %v666
        %v850 = vsel %vm798, %v826, %v667
        %v851 = vsel %vm799, %v814, %v668
        %v852 = vsel %vm799, %v818, %v669
        %v853 = vsel %vm799, %v822, %v670
        %v854 = vsel %vm799, %v826, %v671
        %v855 = vsel %vm800, %v814, %v672
        %v856 = vsel %vm800, %v818, %v673
        %v857 = vsel %vm800, %v822, %v674
        %v858 = vsel %vm800, %v826, %v675
        %v859 = vsel %vm801, %v814, %v676
        %v860 = vsel %vm801, %v818, %v677
        %v861 = vsel %vm801, %v822, %v678
        %v862 = vsel %vm801, %v826, %v679
        %v863 = vsel %vm802, %v814, %v680
        %v864 = vsel %vm802, %v818, %v681
        %v865 = vsel %vm802, %v822, %v682
        %v866 = vsel %vm802, %v826, %v683
        %v867 = vsel %vm803, %v814, %v684
        %v868 = vsel %vm803, %v818, %v685
        %v869 = vsel %vm803, %v822, %v686
        %v870 = vsel %vm803, %v826, %v687
        %v871 = vsel %vm804, %v814, %v688
        %v872 = vsel %vm804, %v818, %v689
        %v873 = vsel %vm804, %v822, %v690
        %v874 = vsel %vm804, %v826, %v691
        %v875 = vsel %vm805, %v814, %v692
        %v876 = vsel %vm805, %v818, %v693
        %v877 = vsel %vm805, %v822, %v694
        %v878 = vsel %vm805, %v826, %v695
        %v879 = vsel %vm806, %v814, %v696
        %v880 = vsel %vm806, %v818, %v697
        %v881 = vsel %vm806, %v822, %v698
        %v882 = vsel %vm806, %v826, %v699
        %v883 = vsel %vm807, %v814, %v700
        %v884 = vsel %vm807, %v818, %v701
        %v885 = vsel %vm807, %v822, %v702
        %v886 = vsel %vm807, %v826, %v703
        %v887 = vsel %vm808, %v814, %v704
        %v888 = vsel %vm808, %v818, %v705
        %v889 = vsel %vm808, %v822, %v706
        %v890 = vsel %vm808, %v826, %v707
        %v891 = vsel %vm809, %v814, %v708
        %v892 = vsel %vm809, %v818, %v709
        %v893 = vsel %vm809, %v822, %v710
        %v894 = vsel %vm809, %v826, %v711
        %v895 = vmul.f32 %v429, %v831
        %v896 = vmul.f32 %v431, %v832
        %v897 = vmul.f32 %v433, %v835
        %v898 = vmul.f32 %v435, %v836
        %v899 = vmul.f32 %v439, %v839
        %v900 = vmul.f32 %v441, %v840
        %v901 = vmul.f32 %v443, %v843
        %v902 = vmul.f32 %v445, %v844
        %v903 = vmul.f32 %v449, %v847
        %v904 = vmul.f32 %v451, %v848
        %v905 = vmul.f32 %v453, %v851
        %v906 = vmul.f32 %v455, %v852
        %v907 = vmul.f32 %v459, %v855
        %v908 = vmul.f32 %v461, %v856
        %v909 = vmul.f32 %v463, %v859
        %v910 = vmul.f32 %v465, %v860
        %v911 = vmul.f32 %v469, %v863
        %v912 = vmul.f32 %v471, %v864
        %v913 = vmul.f32 %v473, %v867
        %v914 = vmul.f32 %v475, %v868
        %v915 = vmul.f32 %v479, %v871
        %v916 = vmul.f32 %v481, %v872
        %v917 = vmul.f32 %v483, %v875
        %v918 = vmul.f32 %v485, %v876
        %v919 = vmul.f32 %v489, %v879
        %v920 = vmul.f32 %v491, %v880
        %v921 = vmul.f32 %v493, %v883
        %v922 = vmul.f32 %v495, %v884
        %v923 = vmul.f32 %v499, %v887
        %v924 = vmul.f32 %v501, %v888
        %v925 = vmul.f32 %v503, %v891
        %v926 = vmul.f32 %v505, %v892
        %v927 = vadd.f32 %v895, %v833
        %v928 = vadd.f32 %v896, %v834
        %v929 = vadd.f32 %v897, %v837
        %v930 = vadd.f32 %v898, %v838
        %v931 = vadd.f32 %v899, %v841
        %v932 = vadd.f32 %v900, %v842
        %v933 = vadd.f32 %v901, %v845
        %v934 = vadd.f32 %v902, %v846
        %v935 = vadd.f32 %v903, %v849
        %v936 = vadd.f32 %v904, %v850
        %v937 = vadd.f32 %v905, %v853
        %v938 = vadd.f32 %v906, %v854
        %v939 = vadd.f32 %v907, %v857
        %v940 = vadd.f32 %v908, %v858
        %v941 = vadd.f32 %v909, %v861
        %v942 = vadd.f32 %v910, %v862
        %v943 = vadd.f32 %v911, %v865
        %v944 = vadd.f32 %v912, %v866
        %v945 = vadd.f32 %v913, %v869
        %v946 = vadd.f32 %v914, %v870
        %v947 = vadd.f32 %v915, %v873
        %v948 = vadd.f32 %v916, %v874
        %v949 = vadd.f32 %v917, %v877
        %v950 = vadd.f32 %v918, %v878
        %v951 = vadd.f32 %v919, %v881
        %v952 = vadd.f32 %v920, %v882
        %v953 = vadd.f32 %v921, %v885
        %v954 = vadd.f32 %v922, %v886
        %v955 = vadd.f32 %v923, %v889
        %v956 = vadd.f32 %v924, %v890
        %v957 = vadd.f32 %v925, %v893
        %v958 = vadd.f32 %v926, %v894
        %vm959 = vcmp.gt.f32.partialorder %v927, 0.0
        %vm960 = vcmp.gt.f32.partialorder %v928, 0.0
        %vm961 = vcmp.gt.f32.partialorder %v929, 0.0
        %vm962 = vcmp.gt.f32.partialorder %v930, 0.0
        %vm963 = vcmp.gt.f32.partialorder %v931, 0.0
        %vm964 = vcmp.gt.f32.partialorder %v932, 0.0
        %vm965 = vcmp.gt.f32.partialorder %v933, 0.0
        %vm966 = vcmp.gt.f32.partialorder %v934, 0.0
        %vm967 = vcmp.gt.f32.partialorder %v935, 0.0
        %vm968 = vcmp.gt.f32.partialorder %v936, 0.0
        %vm969 = vcmp.gt.f32.partialorder %v937, 0.0
        %vm970 = vcmp.gt.f32.partialorder %v938, 0.0
        %vm971 = vcmp.gt.f32.partialorder %v939, 0.0
        %vm972 = vcmp.gt.f32.partialorder %v940, 0.0
        %vm973 = vcmp.gt.f32.partialorder %v941, 0.0
        %vm974 = vcmp.gt.f32.partialorder %v942, 0.0
        %vm975 = vcmp.gt.f32.partialorder %v943, 0.0
        %vm976 = vcmp.gt.f32.partialorder %v944, 0.0
        %vm977 = vcmp.gt.f32.partialorder %v945, 0.0
        %vm978 = vcmp.gt.f32.partialorder %v946, 0.0
        %vm979 = vcmp.gt.f32.partialorder %v947, 0.0
        %vm980 = vcmp.gt.f32.partialorder %v948, 0.0
        %vm981 = vcmp.gt.f32.partialorder %v949, 0.0
        %vm982 = vcmp.gt.f32.partialorder %v950, 0.0
        %vm983 = vcmp.gt.f32.partialorder %v951, 0.0
        %vm984 = vcmp.gt.f32.partialorder %v952, 0.0
        %vm985 = vcmp.gt.f32.partialorder %v953, 0.0
        %vm986 = vcmp.gt.f32.partialorder %v954, 0.0
        %vm987 = vcmp.gt.f32.partialorder %v955, 0.0
        %vm988 = vcmp.gt.f32.partialorder %v956, 0.0
        %vm989 = vcmp.gt.f32.partialorder %v957, 0.0
        %vm990 = vcmp.gt.f32.partialorder %v958, 0.0
        %v991 = vmul.f32 %v927, 0.01
        %v992 = vmul.f32 %v928, 0.01
        %v993 = vmul.f32 %v929, 0.01
        %v994 = vmul.f32 %v930, 0.01
        %v995 = vmul.f32 %v931, 0.01
        %v996 = vmul.f32 %v932, 0.01
        %v997 = vmul.f32 %v933, 0.01
        %v998 = vmul.f32 %v934, 0.01
        %v999 = vmul.f32 %v935, 0.01
        %v1000 = vmul.f32 %v936, 0.01
        %v1001 = vmul.f32 %v937, 0.01
        %v1002 = vmul.f32 %v938, 0.01
        %v1003 = vmul.f32 %v939, 0.01
        %v1004 = vmul.f32 %v940, 0.01
        %v1005 = vmul.f32 %v941, 0.01
        %v1006 = vmul.f32 %v942, 0.01
        %v1007 = vmul.f32 %v943, 0.01
        %v1008 = vmul.f32 %v944, 0.01
        %v1009 = vmul.f32 %v945, 0.01
        %v1010 = vmul.f32 %v946, 0.01
        %v1011 = vmul.f32 %v947, 0.01
        %v1012 = vmul.f32 %v948, 0.01
        %v1013 = vmul.f32 %v949, 0.01
        %v1014 = vmul.f32 %v950, 0.01
        %v1015 = vmul.f32 %v951, 0.01
        %v1016 = vmul.f32 %v952, 0.01
        %v1017 = vmul.f32 %v953, 0.01
        %v1018 = vmul.f32 %v954, 0.01
        %v1019 = vmul.f32 %v955, 0.01
        %v1020 = vmul.f32 %v956, 0.01
        %v1021 = vmul.f32 %v957, 0.01
        %v1022 = vmul.f32 %v958, 0.01
        %v1023 = vsel %vm959, %v927, %v991
        %v1024 = vsel %vm960, %v928, %v992
        %v1025 = vsel %vm961, %v929, %v993
        %v1026 = vsel %vm962, %v930, %v994
        %v1027 = vsel %vm963, %v931, %v995
        %v1028 = vsel %vm964, %v932, %v996
        %v1029 = vsel %vm965, %v933, %v997
        %v1030 = vsel %vm966, %v934, %v998
        %v1031 = vsel %vm967, %v935, %v999
        %v1032 = vsel %vm968, %v936, %v1000
        %v1033 = vsel %vm969, %v937, %v1001
        %v1034 = vsel %vm970, %v938, %v1002
        %v1035 = vsel %vm971, %v939, %v1003
        %v1036 = vsel %vm972, %v940, %v1004
        %v1037 = vsel %vm973, %v941, %v1005
        %v1038 = vsel %vm974, %v942, %v1006
        %v1039 = vsel %vm975, %v943, %v1007
        %v1040 = vsel %vm976, %v944, %v1008
        %v1041 = vsel %vm977, %v945, %v1009
        %v1042 = vsel %vm978, %v946, %v1010
        %v1043 = vsel %vm979, %v947, %v1011
        %v1044 = vsel %vm980, %v948, %v1012
        %v1045 = vsel %vm981, %v949, %v1013
        %v1046 = vsel %vm982, %v950, %v1014
        %v1047 = vsel %vm983, %v951, %v1015
        %v1048 = vsel %vm984, %v952, %v1016
        %v1049 = vsel %vm985, %v953, %v1017
        %v1050 = vsel %vm986, %v954, %v1018
        %v1051 = vsel %vm987, %v955, %v1019
        %v1052 = vsel %vm988, %v956, %v1020
        %v1053 = vsel %vm989, %v957, %v1021
        %v1054 = vsel %vm990, %v958, %v1022
        %v1055 = vpack.c.bf16 %v1026, %v1024
        %v1056 = vpack.c.bf16 %v1030, %v1028
        %v1057 = vpack.c.bf16 %v1034, %v1032
        %v1058 = vpack.c.bf16 %v1038, %v1036
        %v1059 = vpack.c.bf16 %v1042, %v1040
        %v1060 = vpack.c.bf16 %v1046, %v1044
        %v1061 = vpack.c.bf16 %v1050, %v1048
        %v1062 = vpack.c.bf16 %v1054, %v1052
        %v1063 = vld [vmem:[%s3] sm:$0xf]
        %v1064 = vld [vmem:[%s3 + $0x4] sm:$0xf]
        %v1065 = vld [vmem:[%s3 + $0x8] sm:$0xf]
        %v1066 = vld [vmem:[%s3 + $0xc] sm:$0xf]
        %v1067 = vld [vmem:[%s3 + $0x10] sm:$0xf]
        %v1068 = vld [vmem:[%s3 + $0x14] sm:$0xf]
        %v1069 = vld [vmem:[%s3 + $0x18] sm:$0xf]
        %v1070 = vld [vmem:[%s3 + $0x1c] sm:$0xf]
        %v1071 = vld [vmem:[%s3 + $0x20] sm:$0xf]
        %v1072 = vld [vmem:[%s3 + $0x24] sm:$0xf]
        %v1073 = vld [vmem:[%s3 + $0x28] sm:$0xf]
        %v1074 = vld [vmem:[%s3 + $0x2c] sm:$0xf]
        %v1075 = vld [vmem:[%s3 + $0x30] sm:$0xf]
        %v1076 = vld [vmem:[%s3 + $0x34] sm:$0xf]
        %v1077 = vld [vmem:[%s3 + $0x38] sm:$0xf]
        %v1078 = vld [vmem:[%s3 + $0x3c] sm:$0xf]
        %v1095 = vunpack.c.l.b16 %v1063
        %v1096 = vunpack.c.l.b16 %v1064
        %v1097 = vunpack.c.l.b16 %v1065
        %v1098 = vunpack.c.l.b16 %v1066
        %v1099 = vunpack.c.l.b16 %v1067
        %v1100 = vunpack.c.l.b16 %v1068
        %v1101 = vunpack.c.l.b16 %v1069
        %v1102 = vunpack.c.l.b16 %v1070
        %v1103 = vunpack.c.l.b16 %v1071
        %v1104 = vunpack.c.l.b16 %v1072
        %v1105 = vunpack.c.l.b16 %v1073
        %v1106 = vunpack.c.l.b16 %v1074
        %v1107 = vunpack.c.l.b16 %v1075
        %v1108 = vunpack.c.l.b16 %v1076
        %v1109 = vunpack.c.l.b16 %v1077
        %v1110 = vunpack.c.l.b16 %v1078
        %v1111 = vpack.c.b16 %v1096, %v1095
        %v1112 = vpack.c.b16 %v1098, %v1097
        %v1113 = vpack.c.b16 %v1100, %v1099
        %v1114 = vpack.c.b16 %v1102, %v1101
        %v1115 = vpack.c.b16 %v1104, %v1103
        %v1116 = vpack.c.b16 %v1106, %v1105
        %v1117 = vpack.c.b16 %v1108, %v1107
        %v1118 = vpack.c.b16 %v1110, %v1109
        %1127 = vmatprep.subr.bf16.mxu0 0
        %1128 = vmatpush1.bf16.msra.mxu0 %v1118
        %1129 = vmatprep.subr.bf16.mxu0 0
        %1130 = vmatpush1.bf16.msra.mxu0 %v1117
        %1131 = vmatprep.subr.bf16.mxu0 0
        %1132 = vmatpush1.bf16.msra.mxu0 %v1116
        %1133 = vmatprep.subr.bf16.mxu0 0
        %1134 = vmatpush1.bf16.msra.mxu0 %v1115
        %1135 = vmatprep.subr.bf16.mxu0 0
        %1136 = vmatpush1.bf16.msra.mxu0 %v1114
        %1137 = vmatprep.subr.bf16.mxu0 0
        %1138 = vmatpush1.bf16.msra.mxu0 %v1113
        %1139 = vmatprep.subr.bf16.mxu0 0
        %1140 = vmatpush1.bf16.msra.mxu0 %v1112
        %1141 = vmatprep.subr.bf16.mxu0 0
        %1142 = vmatpush1.bf16.msra.mxu0 %v1111
        %1143 = vmatprep.subr.bf16.mxu0 0
        %1144 = vmatpush2.bf16.msra.mxu0 0
        %1145 = vmatprep.subr.bf16.mxu0 0
        %1146 = vmatpush2.bf16.msra.mxu0 0
        %1147 = vmatprep.subr.bf16.mxu0 0
        %1148 = vmatpush2.bf16.msra.mxu0 0
        %1149 = vmatprep.subr.bf16.mxu0 0
        %1150 = vmatpush2.bf16.msra.mxu0 0
        %1151 = vmatprep.subr.bf16.mxu0 0
        %1152 = vmatpush2.bf16.msra.mxu0 0
        %1153 = vmatprep.subr.bf16.mxu0 0
        %1154 = vmatpush2.bf16.msra.mxu0 0
        %1155 = vmatprep.subr.bf16.mxu0 0
        %1156 = vmatpush2.bf16.msra.mxu0 0
        %1157 = vmatprep.subr.bf16.mxu0 0
        %1158 = vmatpush2.bf16.msra.mxu0 0
        %1159 = vmatprep.mubr.bf16.mxu0 0
        %1160 = vmatmul.mubr.bf16.gmra.mxu0 %v1055
        %v1161 = vpop.f32.mrf.mxu0
        %v1162 = vadd.f32 0.0, %v1161
        %v1163 = vpop.f32.mrf.mxu0
        %v1164 = vpop.f32.mrf.mxu0
        %v1165 = vadd.f32 0.0, %v1164
        %v1166 = vpop.f32.mrf.mxu0
        %1167 = vmatprep.mubr.bf16.mxu0 0
        %1168 = vmatmul.mubr.bf16.gmra.mxu0 %v1056
        %v1169 = vpop.f32.mrf.mxu0
        %v1170 = vadd.f32 0.0, %v1169
        %v1171 = vpop.f32.mrf.mxu0
        %v1172 = vpop.f32.mrf.mxu0
        %v1173 = vadd.f32 0.0, %v1172
        %v1174 = vpop.f32.mrf.mxu0
        %1175 = vmatprep.mubr.bf16.mxu0 0
        %1176 = vmatmul.mubr.bf16.gmra.mxu0 %v1057
        %v1177 = vpop.f32.mrf.mxu0
        %v1178 = vadd.f32 0.0, %v1177
        %v1179 = vpop.f32.mrf.mxu0
        %v1180 = vpop.f32.mrf.mxu0
        %v1181 = vadd.f32 0.0, %v1180
        %v1182 = vpop.f32.mrf.mxu0
        %1183 = vmatprep.mubr.bf16.mxu0 0
        %1184 = vmatmul.mubr.bf16.gmra.mxu0 %v1058
        %v1185 = vpop.f32.mrf.mxu0
        %v1186 = vadd.f32 0.0, %v1185
        %v1187 = vpop.f32.mrf.mxu0
        %v1188 = vpop.f32.mrf.mxu0
        %v1189 = vadd.f32 0.0, %v1188
        %v1190 = vpop.f32.mrf.mxu0
        %1191 = vmatprep.mubr.bf16.mxu0 0
        %1192 = vmatmul.mubr.bf16.gmra.mxu0 %v1059
        %v1193 = vpop.f32.mrf.mxu0
        %v1194 = vadd.f32 0.0, %v1193
        %v1195 = vpop.f32.mrf.mxu0
        %v1196 = vpop.f32.mrf.mxu0
        %v1197 = vadd.f32 0.0, %v1196
        %v1198 = vpop.f32.mrf.mxu0
        %1199 = vmatprep.mubr.bf16.mxu0 0
        %1200 = vmatmul.mubr.bf16.gmra.mxu0 %v1060
        %v1201 = vpop.f32.mrf.mxu0
        %v1202 = vadd.f32 0.0, %v1201
        %v1203 = vpop.f32.mrf.mxu0
        %v1204 = vpop.f32.mrf.mxu0
        %v1205 = vadd.f32 0.0, %v1204
        %v1206 = vpop.f32.mrf.mxu0
        %1207 = vmatprep.mubr.bf16.mxu0 0
        %1208 = vmatmul.mubr.bf16.gmra.mxu0 %v1061
        %v1209 = vpop.f32.mrf.mxu0
        %v1210 = vadd.f32 0.0, %v1209
        %v1211 = vpop.f32.mrf.mxu0
        %v1212 = vpop.f32.mrf.mxu0
        %v1213 = vadd.f32 0.0, %v1212
        %v1214 = vpop.f32.mrf.mxu0
        %1215 = vmatprep.mubr.bf16.mxu0 0
        %1216 = vmatmul.mubr.bf16.gmra.mxu0 %v1062
        %v1217 = vpop.f32.mrf.mxu0
        %v1218 = vadd.f32 0.0, %v1217
        %v1219 = vpop.f32.mrf.mxu0
        %v1220 = vpop.f32.mrf.mxu0
        %v1221 = vadd.f32 0.0, %v1220
        %v1222 = vpop.f32.mrf.mxu0
        %1223 = vdwg.mxu0
        %s1224 = scalar_lea.vmem %s4, 16
        %v1225 = vld [vmem:[%s1224] ss:$4 sm:$0x3]
        %v1227 = vlaneseq
        %v1228 = vshrl.u32 %v1227, 7
        %v1229 = vsub.s32 0, %v1228
        %v1230 = vrot.slane %v1225, %v1229
        %v1231 = vlaneseq
        %v1232 = vshrl.u32 %v1231, 7
        %v1233 = vsub.s32 1, %v1232
        %v1234 = vrot.slane %v1225, %v1233
        %s1237 = scalar_lea.vmem %s4, 17
        %v1238 = vld [vmem:[%s1237] ss:$4 sm:$0x3]
        %v1240 = vlaneseq
        %v1241 = vshrl.u32 %v1240, 7
        %v1242 = vsub.s32 0, %v1241
        %v1243 = vrot.slane %v1238, %v1242
        %v1244 = vlaneseq
        %v1245 = vshrl.u32 %v1244, 7
        %v1246 = vsub.s32 1, %v1245
        %v1247 = vrot.slane %v1238, %v1246
        %v1250 = vsel %vm611, %v1243, %v1230
        %v1251 = vsel %vm611, %v1247, %v1234
        %v1252 = vsel %vm612, %v1243, %v1230
        %v1253 = vsel %vm612, %v1247, %v1234
        %v1254 = vsel %vm613, %v1243, %v1230
        %v1255 = vsel %vm613, %v1247, %v1234
        %v1256 = vsel %vm614, %v1243, %v1230
        %v1257 = vsel %vm614, %v1247, %v1234
        %v1258 = vsel %vm615, %v1243, %v1230
        %v1259 = vsel %vm615, %v1247, %v1234
        %v1260 = vsel %vm616, %v1243, %v1230
        %v1261 = vsel %vm616, %v1247, %v1234
        %v1262 = vsel %vm617, %v1243, %v1230
        %v1263 = vsel %vm617, %v1247, %v1234
        %v1264 = vsel %vm618, %v1243, %v1230
        %v1265 = vsel %vm618, %v1247, %v1234
        %v1266 = vsel %vm619, %v1243, %v1230
        %v1267 = vsel %vm619, %v1247, %v1234
        %v1268 = vsel %vm620, %v1243, %v1230
        %v1269 = vsel %vm620, %v1247, %v1234
        %v1270 = vsel %vm621, %v1243, %v1230
        %v1271 = vsel %vm621, %v1247, %v1234
        %v1272 = vsel %vm622, %v1243, %v1230
        %v1273 = vsel %vm622, %v1247, %v1234
        %v1274 = vsel %vm623, %v1243, %v1230
        %v1275 = vsel %vm623, %v1247, %v1234
        %v1276 = vsel %vm624, %v1243, %v1230
        %v1277 = vsel %vm624, %v1247, %v1234
        %v1278 = vsel %vm625, %v1243, %v1230
        %v1279 = vsel %vm625, %v1247, %v1234
        %v1280 = vsel %vm626, %v1243, %v1230
        %v1281 = vsel %vm626, %v1247, %v1234
        %s1282 = scalar_lea.vmem %s4, 18
        %v1283 = vld [vmem:[%s1282] ss:$4 sm:$0x3]
        %v1285 = vlaneseq
        %v1286 = vshrl.u32 %v1285, 7
        %v1287 = vsub.s32 0, %v1286
        %v1288 = vrot.slane %v1283, %v1287
        %v1289 = vlaneseq
        %v1290 = vshrl.u32 %v1289, 7
        %v1291 = vsub.s32 1, %v1290
        %v1292 = vrot.slane %v1283, %v1291
        %v1295 = vsel %vm794, %v1288, %v1250
        %v1296 = vsel %vm794, %v1292, %v1251
        %v1297 = vsel %vm795, %v1288, %v1252
        %v1298 = vsel %vm795, %v1292, %v1253
        %v1299 = vsel %vm796, %v1288, %v1254
        %v1300 = vsel %vm796, %v1292, %v1255
        %v1301 = vsel %vm797, %v1288, %v1256
        %v1302 = vsel %vm797, %v1292, %v1257
        %v1303 = vsel %vm798, %v1288, %v1258
        %v1304 = vsel %vm798, %v1292, %v1259
        %v1305 = vsel %vm799, %v1288, %v1260
        %v1306 = vsel %vm799, %v1292, %v1261
        %v1307 = vsel %vm800, %v1288, %v1262
        %v1308 = vsel %vm800, %v1292, %v1263
        %v1309 = vsel %vm801, %v1288, %v1264
        %v1310 = vsel %vm801, %v1292, %v1265
        %v1311 = vsel %vm802, %v1288, %v1266
        %v1312 = vsel %vm802, %v1292, %v1267
        %v1313 = vsel %vm803, %v1288, %v1268
        %v1314 = vsel %vm803, %v1292, %v1269
        %v1315 = vsel %vm804, %v1288, %v1270
        %v1316 = vsel %vm804, %v1292, %v1271
        %v1317 = vsel %vm805, %v1288, %v1272
        %v1318 = vsel %vm805, %v1292, %v1273
        %v1319 = vsel %vm806, %v1288, %v1274
        %v1320 = vsel %vm806, %v1292, %v1275
        %v1321 = vsel %vm807, %v1288, %v1276
        %v1322 = vsel %vm807, %v1292, %v1277
        %v1323 = vsel %vm808, %v1288, %v1278
        %v1324 = vsel %vm808, %v1292, %v1279
        %v1325 = vsel %vm809, %v1288, %v1280
        %v1326 = vsel %vm809, %v1292, %v1281
        %v1327 = vmul.f32 %v1162, %v1295
        %v1328 = vmul.f32 %v1165, %v1297
        %v1329 = vmul.f32 %v1170, %v1299
        %v1330 = vmul.f32 %v1173, %v1301
        %v1331 = vmul.f32 %v1178, %v1303
        %v1332 = vmul.f32 %v1181, %v1305
        %v1333 = vmul.f32 %v1186, %v1307
        %v1334 = vmul.f32 %v1189, %v1309
        %v1335 = vmul.f32 %v1194, %v1311
        %v1336 = vmul.f32 %v1197, %v1313
        %v1337 = vmul.f32 %v1202, %v1315
        %v1338 = vmul.f32 %v1205, %v1317
        %v1339 = vmul.f32 %v1210, %v1319
        %v1340 = vmul.f32 %v1213, %v1321
        %v1341 = vmul.f32 %v1218, %v1323
        %v1342 = vmul.f32 %v1221, %v1325
        %v1343 = vadd.f32 %v1327, %v1296
        %v1344 = vadd.f32 %v1328, %v1298
        %v1345 = vadd.f32 %v1329, %v1300
        %v1346 = vadd.f32 %v1330, %v1302
        %v1347 = vadd.f32 %v1331, %v1304
        %v1348 = vadd.f32 %v1332, %v1306
        %v1349 = vadd.f32 %v1333, %v1308
        %v1350 = vadd.f32 %v1334, %v1310
        %v1351 = vadd.f32 %v1335, %v1312
        %v1352 = vadd.f32 %v1336, %v1314
        %v1353 = vadd.f32 %v1337, %v1316
        %v1354 = vadd.f32 %v1338, %v1318
        %v1355 = vadd.f32 %v1339, %v1320
        %v1356 = vadd.f32 %v1340, %v1322
        %v1357 = vadd.f32 %v1341, %v1324
        %v1358 = vadd.f32 %v1342, %v1326
        %vm1359 = vcmp.gt.f32.partialorder %v1343, 0.0
        %vm1360 = vcmp.gt.f32.partialorder %v1344, 0.0
        %vm1361 = vcmp.gt.f32.partialorder %v1345, 0.0
        %vm1362 = vcmp.gt.f32.partialorder %v1346, 0.0
        %vm1363 = vcmp.gt.f32.partialorder %v1347, 0.0
        %vm1364 = vcmp.gt.f32.partialorder %v1348, 0.0
        %vm1365 = vcmp.gt.f32.partialorder %v1349, 0.0
        %vm1366 = vcmp.gt.f32.partialorder %v1350, 0.0
        %vm1367 = vcmp.gt.f32.partialorder %v1351, 0.0
        %vm1368 = vcmp.gt.f32.partialorder %v1352, 0.0
        %vm1369 = vcmp.gt.f32.partialorder %v1353, 0.0
        %vm1370 = vcmp.gt.f32.partialorder %v1354, 0.0
        %vm1371 = vcmp.gt.f32.partialorder %v1355, 0.0
        %vm1372 = vcmp.gt.f32.partialorder %v1356, 0.0
        %vm1373 = vcmp.gt.f32.partialorder %v1357, 0.0
        %vm1374 = vcmp.gt.f32.partialorder %v1358, 0.0
        %v1375 = vmul.f32 %v1343, 0.01
        %v1376 = vmul.f32 %v1344, 0.01
        %v1377 = vmul.f32 %v1345, 0.01
        %v1378 = vmul.f32 %v1346, 0.01
        %v1379 = vmul.f32 %v1347, 0.01
        %v1380 = vmul.f32 %v1348, 0.01
        %v1381 = vmul.f32 %v1349, 0.01
        %v1382 = vmul.f32 %v1350, 0.01
        %v1383 = vmul.f32 %v1351, 0.01
        %v1384 = vmul.f32 %v1352, 0.01
        %v1385 = vmul.f32 %v1353, 0.01
        %v1386 = vmul.f32 %v1354, 0.01
        %v1387 = vmul.f32 %v1355, 0.01
        %v1388 = vmul.f32 %v1356, 0.01
        %v1389 = vmul.f32 %v1357, 0.01
        %v1390 = vmul.f32 %v1358, 0.01
        %v1391 = vsel %vm1359, %v1343, %v1375
        %v1392 = vsel %vm1360, %v1344, %v1376
        %v1393 = vsel %vm1361, %v1345, %v1377
        %v1394 = vsel %vm1362, %v1346, %v1378
        %v1395 = vsel %vm1363, %v1347, %v1379
        %v1396 = vsel %vm1364, %v1348, %v1380
        %v1397 = vsel %vm1365, %v1349, %v1381
        %v1398 = vsel %vm1366, %v1350, %v1382
        %v1399 = vsel %vm1367, %v1351, %v1383
        %v1400 = vsel %vm1368, %v1352, %v1384
        %v1401 = vsel %vm1369, %v1353, %v1385
        %v1402 = vsel %vm1370, %v1354, %v1386
        %v1403 = vsel %vm1371, %v1355, %v1387
        %v1404 = vsel %vm1372, %v1356, %v1388
        %v1405 = vsel %vm1373, %v1357, %v1389
        %v1406 = vsel %vm1374, %v1358, %v1390
        %v1407 = vadd.f32 %v1023, %v1391
        %v1408 = vadd.f32 %v1025, %v1392
        %v1409 = vadd.f32 %v1027, %v1393
        %v1410 = vadd.f32 %v1029, %v1394
        %v1411 = vadd.f32 %v1031, %v1395
        %v1412 = vadd.f32 %v1033, %v1396
        %v1413 = vadd.f32 %v1035, %v1397
        %v1414 = vadd.f32 %v1037, %v1398
        %v1415 = vadd.f32 %v1039, %v1399
        %v1416 = vadd.f32 %v1041, %v1400
        %v1417 = vadd.f32 %v1043, %v1401
        %v1418 = vadd.f32 %v1045, %v1402
        %v1419 = vadd.f32 %v1047, %v1403
        %v1420 = vadd.f32 %v1049, %v1404
        %v1421 = vadd.f32 %v1051, %v1405
        %v1422 = vadd.f32 %v1053, %v1406
        %vm1423 = vcmp.gt.f32.partialorder %v1407, 0.0
        %vm1424 = vcmp.gt.f32.partialorder %v1408, 0.0
        %vm1425 = vcmp.gt.f32.partialorder %v1409, 0.0
        %vm1426 = vcmp.gt.f32.partialorder %v1410, 0.0
        %vm1427 = vcmp.gt.f32.partialorder %v1411, 0.0
        %vm1428 = vcmp.gt.f32.partialorder %v1412, 0.0
        %vm1429 = vcmp.gt.f32.partialorder %v1413, 0.0
        %vm1430 = vcmp.gt.f32.partialorder %v1414, 0.0
        %vm1431 = vcmp.gt.f32.partialorder %v1415, 0.0
        %vm1432 = vcmp.gt.f32.partialorder %v1416, 0.0
        %vm1433 = vcmp.gt.f32.partialorder %v1417, 0.0
        %vm1434 = vcmp.gt.f32.partialorder %v1418, 0.0
        %vm1435 = vcmp.gt.f32.partialorder %v1419, 0.0
        %vm1436 = vcmp.gt.f32.partialorder %v1420, 0.0
        %vm1437 = vcmp.gt.f32.partialorder %v1421, 0.0
        %vm1438 = vcmp.gt.f32.partialorder %v1422, 0.0
        %v1439 = vmul.f32 %v1407, 0.01
        %v1440 = vmul.f32 %v1408, 0.01
        %v1441 = vmul.f32 %v1409, 0.01
        %v1442 = vmul.f32 %v1410, 0.01
        %v1443 = vmul.f32 %v1411, 0.01
        %v1444 = vmul.f32 %v1412, 0.01
        %v1445 = vmul.f32 %v1413, 0.01
        %v1446 = vmul.f32 %v1414, 0.01
        %v1447 = vmul.f32 %v1415, 0.01
        %v1448 = vmul.f32 %v1416, 0.01
        %v1449 = vmul.f32 %v1417, 0.01
        %v1450 = vmul.f32 %v1418, 0.01
        %v1451 = vmul.f32 %v1419, 0.01
        %v1452 = vmul.f32 %v1420, 0.01
        %v1453 = vmul.f32 %v1421, 0.01
        %v1454 = vmul.f32 %v1422, 0.01
        %v1455 = vsel %vm1423, %v1407, %v1439
        %v1456 = vsel %vm1424, %v1408, %v1440
        %v1457 = vsel %vm1425, %v1409, %v1441
        %v1458 = vsel %vm1426, %v1410, %v1442
        %v1459 = vsel %vm1427, %v1411, %v1443
        %v1460 = vsel %vm1428, %v1412, %v1444
        %v1461 = vsel %vm1429, %v1413, %v1445
        %v1462 = vsel %vm1430, %v1414, %v1446
        %v1463 = vsel %vm1431, %v1415, %v1447
        %v1464 = vsel %vm1432, %v1416, %v1448
        %v1465 = vsel %vm1433, %v1417, %v1449
        %v1466 = vsel %vm1434, %v1418, %v1450
        %v1467 = vsel %vm1435, %v1419, %v1451
        %v1468 = vsel %vm1436, %v1420, %v1452
        %v1469 = vsel %vm1437, %v1421, %v1453
        %v1470 = vsel %vm1438, %v1422, %v1454
        %v1471 = vpack.c.bf16 %v1456, %v1455
        %v1472 = vpack.c.bf16 %v1458, %v1457
        %v1473 = vpack.c.bf16 %v1460, %v1459
        %v1474 = vpack.c.bf16 %v1462, %v1461
        %v1475 = vpack.c.bf16 %v1464, %v1463
        %v1476 = vpack.c.bf16 %v1466, %v1465
        %v1477 = vpack.c.bf16 %v1468, %v1467
        %v1478 = vpack.c.bf16 %v1470, %v1469
        %v1487 = vunpack.c.l.b16 %v1471
        %v1488 = vunpack.c.h.b16 %v1471
        %v1489 = vunpack.c.l.b16 %v1472
        %v1490 = vunpack.c.h.b16 %v1472
        %v1491 = vunpack.c.l.b16 %v1473
        %v1492 = vunpack.c.h.b16 %v1473
        %v1493 = vunpack.c.l.b16 %v1474
        %v1494 = vunpack.c.h.b16 %v1474
        %v1495 = vunpack.c.l.b16 %v1475
        %v1496 = vunpack.c.h.b16 %v1475
        %v1497 = vunpack.c.l.b16 %v1476
        %v1498 = vunpack.c.h.b16 %v1476
        %v1499 = vunpack.c.l.b16 %v1477
        %v1500 = vunpack.c.h.b16 %v1477
        %v1501 = vunpack.c.l.b16 %v1478
        %v1502 = vunpack.c.h.b16 %v1478
        %v1503 = vpack.c.b16 %v1487, %v1487
        %v1504 = vpack.c.b16 %v1488, %v1488
        %v1505 = vpack.c.b16 %v1489, %v1489
        %v1506 = vpack.c.b16 %v1490, %v1490
        %v1507 = vpack.c.b16 %v1491, %v1491
        %v1508 = vpack.c.b16 %v1492, %v1492
        %v1509 = vpack.c.b16 %v1493, %v1493
        %v1510 = vpack.c.b16 %v1494, %v1494
        %v1511 = vpack.c.b16 %v1495, %v1495
        %v1512 = vpack.c.b16 %v1496, %v1496
        %v1513 = vpack.c.b16 %v1497, %v1497
        %v1514 = vpack.c.b16 %v1498, %v1498
        %v1515 = vpack.c.b16 %v1499, %v1499
        %v1516 = vpack.c.b16 %v1500, %v1500
        %v1517 = vpack.c.b16 %v1501, %v1501
        %v1518 = vpack.c.b16 %v1502, %v1502
        %1535 = vst [vmem:[%s234] sm:$0xf] %v1503
        %1536 = vst [vmem:[%s234 + $0x4] sm:$0xf] %v1504
        %1537 = vst [vmem:[%s234 + $0x8] sm:$0xf] %v1505
        %1538 = vst [vmem:[%s234 + $0xc] sm:$0xf] %v1506
        %1539 = vst [vmem:[%s234 + $0x10] sm:$0xf] %v1507
        %1540 = vst [vmem:[%s234 + $0x14] sm:$0xf] %v1508
        %1541 = vst [vmem:[%s234 + $0x18] sm:$0xf] %v1509
        %1542 = vst [vmem:[%s234 + $0x1c] sm:$0xf] %v1510
        %1543 = vst [vmem:[%s234 + $0x20] sm:$0xf] %v1511
        %1544 = vst [vmem:[%s234 + $0x24] sm:$0xf] %v1512
        %1545 = vst [vmem:[%s234 + $0x28] sm:$0xf] %v1513
        %1546 = vst [vmem:[%s234 + $0x2c] sm:$0xf] %v1514
        %1547 = vst [vmem:[%s234 + $0x30] sm:$0xf] %v1515
        %1548 = vst [vmem:[%s234 + $0x34] sm:$0xf] %v1516
        %1549 = vst [vmem:[%s234 + $0x38] sm:$0xf] %v1517
        %1550 = vst [vmem:[%s234 + $0x3c] sm:$0xf] %v1518
        %s1551 = sand.u32 %s142, 1
        %s1552 = scalar_lea.sflag [#allocation3], %s1551
        %s1553 = sand.u32 %s142, 1
        %s1554 = smul.addr %s1553, 64
        %s1555 = scalar_lea.vmem [#allocation2], %s1554
        // Predicated region
        $region41: #{tpu_custom_call.1} parent=39 // pred_check
          %p1556 = pneg %p152
        $region42: #{tpu_custom_call.1} parent=39 // pred_check_branch
          %1558 = sbr.rel (%p1556) target = $region44
        $region43: #{tpu_custom_call.1} parent=39 // pred_region
          %s1559 = smul.u32 16, %s19
          %s1561 = ssub.s32 1024, 1024
          %1562 = vsyncadd %s1552, %s1561
          %s1563 = smul.addr %s1559, 64
          %s1564 = scalar_lea.hbm %s5, %s1563
          %s1565 = sshll.u32 %s1555, 4
          %s1566 = int_to_ptr.vmem [resolvable:$true] %s1565
          %1571 = dma.vmem_to_hbm [thread:$0]  %s1566, 1024, %s1564, %s1552, 64, 64, 4
        $region44: #{tpu_custom_call.1} parent=39 // pred_fallthru
          _
      $region40: #{tpu_custom_call.1} parent=5 // pred_fallthru
        _
      %p1572 = scmp.le.s32.totalorder 2, %s14
      // Predicated region
      $region45: #{tpu_custom_call.1} parent=5 // pred_check
        %p1573 = pneg %p1572
      $region46: #{tpu_custom_call.1} parent=5 // pred_check_branch
        %1575 = sbr.rel (%p1573) target = $region48
      $region47: #{tpu_custom_call.1} parent=5 // pred_region
        %s1576 = ssub.s32 %s14, 2
        // Predicated region
        $region49: #{tpu_custom_call.1} parent=47 // pred_check
          %p1577 = pneg %p158
        $region50: #{tpu_custom_call.1} parent=47 // pred_check_branch
          %1579 = sbr.rel (%p1577) target = $region52
        $region51: #{tpu_custom_call.1} parent=47 // pred_region
          %s1580 = sand.u32 %s143, 1
          %s1581 = scalar_lea.sflag [#allocation3], %s1580
          %s1582 = sand.u32 %s143, 1
          %s1583 = smul.addr %s1582, 64
          %s1584 = scalar_lea.vmem [#allocation2], %s1583
          %1585 = dma.done %s1581, 1024
        $region52: #{tpu_custom_call.1} parent=47 // pred_fallthru
          _
      $region48: #{tpu_custom_call.1} parent=5 // pred_fallthru
        _
    $region6: #{tpu_custom_call.1} parent=1 // loop_footer
      %s18 = sadd.s32 1, %s14
    $region7: #{tpu_custom_call.1} parent=1 // loop_footer_branch
      %13 = sbr.rel target = $region3
    $region8: #{tpu_custom_call.1} parent=1 // loop_exit
      _
    %1586 = vsyncpa [#allocation3], 1
    %s1587 = scalar_lea.sflag [#allocation3], 1
    %1588 = vsyncpa %s1587, 1

</llo_original>
